<compile_context>
chip_gen: v5e
topology: v5e:2x2
jax: 0.10.0
libtpu: 0.0.40
codegen_flags: <defaults>
</compile_context>

<pallas_src>
import functools
from dataclasses import dataclass

import numpy as np
import jax
import jax.numpy as jnp
from jax.experimental import pallas as pl
from jax.experimental.pallas import tpu as pltpu

LANE = 128


def _round_up(x, m):
    return (x + m - 1) // m * m


# -----------------------------------------------------------------------------
# Pallas kernel: value-function forward for one batch tile of token-id rows.
# -----------------------------------------------------------------------------
def _q_value_kernel(Ls, La, Vp, tok_ref, w_fold_ref, b1_ref, w2_ref, b2_ref,
                    out_ref):
    """tok_ref   : [tile_n, Ls+La] int32  (state ids | action ids)
       w_fold_ref: [2*Vp, Hp] bf16        pack-time fold of (emb @ W1{s,a})/L{s,a}
       b1/w2     : [1, Hp] f32, b2: [1,1] f32 (SMEM)
       out_ref   : [tile_n, LANE] f32     lane-dense slab (col 0 holds q)"""
    tile_n = tok_ref.shape[0]
    tok = tok_ref[...]
    lane_ids = jax.lax.broadcasted_iota(jnp.int32, (tile_n, Vp), 1)

    def counts(col0, L):
        # counts[n, v] = #{l : tok[n, col0+l] == v}; L small & static so the
        # compares fully unroll into 2-D VPU ops over Vp lanes only.
        # Out-of-range ids (>= Vp) match no lane and contribute zero, matching
        # the zero-padded W_fold rows.
        c = jnp.zeros((tile_n, Vp), jnp.float32)
        for l in range(L):
            c = c + (tok[:, col0 + l:col0 + l + 1] == lane_ids).astype(jnp.float32)
        return c

    counts_s = counts(0, Ls)
    counts_a = counts(Ls, La)
    # Single fused MXU push with K = 2*Vp (fills the 256-deep MXU on v6e/v7x).
    # Counts are small exact integers (<= Ls+La), so the bf16 cast is lossless.
    counts_sa = jnp.concatenate([counts_s, counts_a], axis=-1).astype(jnp.bfloat16)
    h = jnp.dot(counts_sa, w_fold_ref[...], preferred_element_type=jnp.float32)
    h = jnp.maximum(h + b1_ref[...], 0.0)                            # [tile_n, Hp]

    # Width-1 output projection on the VPU + lane reduce (MXU would be 1/128
    # utilised); sigmoid via EUP exp + approximate reciprocal (free slot).
    logit = jnp.sum(h * w2_ref[...], axis=-1, keepdims=True) + b2_ref[0, 0]
    q = pl.reciprocal(1.0 + jnp.exp(-logit), approx=True)            # [tile_n, 1]

    # Lane-dense store into the padded 128-lane output slab (unmasked vst).
    # TODO(synk): for large N on v5e, XLU-transpose q into a [1, tile_n] row and
    # emit a [grid, tile_n] output to cut HBM writeback 128x.
    out_ref[...] = jnp.broadcast_to(q, out_ref.shape)


# -----------------------------------------------------------------------------
# Wrapper: pack/fold weights, tile the batch, run the kernel.
# -----------------------------------------------------------------------------
def pack_params(params, state_len, action_len, dtype=jnp.bfloat16):
    """Pack-time (one-off) weight prep: fold emb@W1{s,a} and the 1/L mean-pool
    scales into a single [2*Vp, Hp] table; pad to 128 lanes; w2 as a lane row."""
    emb, w1s, w1a, b1, w2, b2 = params
    V, _ = emb.shape
    H = w1s.shape[1]
    Vp, Hp = _round_up(V, LANE), _round_up(H, LANE)
    w_fold = jnp.zeros((2 * Vp, Hp), jnp.float32)
    w_fold = w_fold.at[:V, :H].set((emb @ w1s) / float(state_len))
    w_fold = w_fold.at[Vp:Vp + V, :H].set((emb @ w1a) / float(action_len))
    b1_p = jnp.zeros((1, Hp), jnp.float32).at[:, :H].set(b1)
    w2_row = jnp.zeros((1, Hp), jnp.float32).at[:, :H].set(w2[:, 0][None, :])
    b2_p = jnp.asarray(b2, jnp.float32).reshape(1, 1)
    return w_fold.astype(dtype), b1_p, w2_row, b2_p


def q_values_pallas(s_tokens, a_tokens, packed, *, batch_tile=256):
    w_fold, b1_p, w2_row, b2_p = packed
    n, Ls = s_tokens.shape
    _, La = a_tokens.shape
    two_vp, Hp = w_fold.shape
    Vp = two_vp // 2

    # >= 2 grid tiles whenever the batch allows it so the "parallel" axis shards
    # across both v7x TensorCores; cap at batch_tile (sweep 256/512) to amortise
    # the ~0.35us/step grid overhead on large batches.
    tile_n = min(batch_tile, max(8, _round_up(-(-n // 2), 8)))
    n_pad = _round_up(n, tile_n)

    # Single concatenated token array -> one input DMA per grid step.
    tok = jnp.zeros((n_pad, Ls + La), jnp.int32)
    tok = tok.at[:n, :Ls].set(s_tokens.astype(jnp.int32))
    tok = tok.at[:n, Ls:].set(a_tokens.astype(jnp.int32))

    kernel = functools.partial(_q_value_kernel, Ls, La, Vp)

    def build(weight_buffers):
        # Resident (constant-index) weight blocks: single-buffer so a second
        # copy of W_fold never sits in VMEM (matters on v7x at real vocab).
        wkw = {} if weight_buffers is None else {
            "pipeline_mode": pl.Buffered(weight_buffers)}
        return pl.pallas_call(
            kernel,
            out_shape=jax.ShapeDtypeStruct((n_pad, LANE), jnp.float32),
            grid_spec=pltpu.PrefetchScalarGridSpec(
                num_scalar_prefetch=0,
                grid=(n_pad // tile_n,),
                in_specs=[
                    pl.BlockSpec((tile_n, Ls + La), lambda i: (i, 0)),       # tokens
                    pl.BlockSpec((2 * Vp, Hp), lambda i: (0, 0), **wkw),     # W_fold
                    pl.BlockSpec((1, Hp), lambda i: (0, 0), **wkw),          # b1
                    pl.BlockSpec((1, Hp), lambda i: (0, 0), **wkw),          # w2 row
                    pl.BlockSpec(memory_space=pltpu.MemorySpace.SMEM),       # b2
                ],
                out_specs=pl.BlockSpec((tile_n, LANE), lambda i: (i, 0)),
            ),
            compiler_params=pltpu.CompilerParams(
                dimension_semantics=("parallel",),
                # 32 MiB is safe on v5e/v6e/v7x alike; raise to 64-96 MiB on
                # v5e/v6e if larger resident tables / batch tiles are used.
                vmem_limit_bytes=32 * 1024 * 1024,
            ),
        )

    try:
        out = build(1)(tok, w_fold, b1_p, w2_row, b2_p)
    except Exception:
        # pl.Buffered(1) not supported by this JAX version: fall back to the
        # default double-buffered weight blocks (correctness unchanged).
        out = build(None)(tok, w_fold, b1_p, w2_row, b2_p)
    return out[:n, 0]


def q_values_reference(s_tokens, a_tokens, params):
    emb, w1s, w1a, b1, w2, b2 = params
    s_emb = emb[s_tokens].mean(axis=1)
    a_emb = emb[a_tokens].mean(axis=1)
    h = jnp.maximum(s_emb @ w1s + a_emb @ w1a + b1, 0.0)
    return jax.nn.sigmoid(h @ w2 + b2)[:, 0]


# -----------------------------------------------------------------------------
# Glue mirroring the PyTorch adapter: forward(actions) pulls the last fact of
# each action's state plus the action string, tokenizes them, runs the kernel.
# -----------------------------------------------------------------------------
@dataclass
class State:
    facts: list


@dataclass
class Action:
    state: State
    action: str


def _tokenize(text, length, vocab):
    ids = [(ord(c) % (vocab - 1)) + 1 for c in text[:length]]
    return ids + [0] * (length - len(ids))


class LearnerValueFunctionAdapter:
    """JAX/Pallas port of the adapter: forward(actions) -> per-action Q value."""

    def __init__(self, params, vocab, state_len, action_len):
        self.params = params                                   # raw f32 params
        self.packed = pack_params(params, state_len, action_len)
        self.vocab = vocab
        self.state_len = state_len
        self.action_len = action_len

    def _encode(self, texts, length):
        return jnp.asarray([_tokenize(t, length, self.vocab) for t in texts],
                           dtype=jnp.int32)

    def forward(self, actions):
        s = [a.state.facts[-1] for a in actions]
        a = [a.action for a in actions]
        s_tok = self._encode(s, self.state_len)
        a_tok = self._encode(a, self.action_len)
        return q_values_pallas(s_tok, a_tok, self.packed)

    def __call__(self, actions):
        return self.forward(actions)

    def embed_states(self, states):
        tok = self._encode([s.facts[-1] for s in states], self.state_len)
        return self.params[0][tok].mean(axis=1)

    def embed_actions(self, actions):
        tok = self._encode([a.action for a in actions], self.action_len)
        return self.params[0][tok].mean(axis=1)

    def name(self):
        return 'LearnerValueFunctionAdapter'


def make_params(key, vocab, dim, hidden):
    k0, k1, k2, k3 = jax.random.split(key, 4)
    emb = 0.1 * jax.random.normal(k0, (vocab, dim), jnp.float32)
    w1s = 0.1 * jax.random.normal(k1, (dim, hidden), jnp.float32)
    w1a = 0.1 * jax.random.normal(k2, (dim, hidden), jnp.float32)
    b1 = jnp.zeros((1, hidden), jnp.float32)
    w2 = 0.1 * jax.random.normal(k3, (hidden, 1), jnp.float32)
    b2 = jnp.zeros((1, 1), jnp.float32)
    return emb, w1s, w1a, b1, w2, b2


if __name__ == "__main__":
    # Small deterministic setup.
    N, STATE_LEN, ACTION_LEN = 8, 16, 8
    VOCAB, DIM, HIDDEN = 64, 32, 32

    key = jax.random.PRNGKey(0)
    params = make_params(key, VOCAB, DIM, HIDDEN)
    adapter = LearnerValueFunctionAdapter(params, VOCAB, STATE_LEN, ACTION_LEN)

    # Deterministic synthetic actions (mirrors a.state.facts[-1] / a.action).
    actions = [
        Action(state=State(facts=["axiom", f"(= x{i} (+ {i} {i+1}))"]),
               action=f"rewrite x{i} -> {i * 2 + 1}")
        for i in range(N)
    ]

    q = adapter(actions)
    jax.block_until_ready(q)

    # Correctness check against a pure-JAX reference of the same model
    # (tolerance accounts for bf16 folded weights + approx reciprocal).
    s_tok = adapter._encode([a.state.facts[-1] for a in actions], STATE_LEN)
    a_tok = adapter._encode([a.action for a in actions], ACTION_LEN)
    q_ref = q_values_reference(s_tok, a_tok, params)
    np.testing.assert_allclose(np.asarray(q), np.asarray(q_ref),
                               rtol=1e-2, atol=1e-3)

    # TODO(synk): beam-search rollout / aggregate / recover_solutions are
    # host-side control flow over Python objects and stay in Python.
    print("KERNEL_OK")
</pallas_src>

<mosaic_0001>
module attributes {stable_mosaic.version = 11 : i64} {
  func.func @_q_value_kernel(%arg0: i32, %arg1: memref<8x24xi32, #tpu.memory_space<vmem>>, %arg2: memref<256x128xbf16, #tpu.memory_space<vmem>>, %arg3: memref<1x128xf32, #tpu.memory_space<vmem>>, %arg4: memref<1x128xf32, #tpu.memory_space<vmem>>, %arg5: memref<1x1xf32, #tpu.memory_space<smem>>, %arg6: memref<8x128xf32, #tpu.memory_space<vmem>>) attributes {dimension_semantics = [#tpu.dimension_semantics<parallel>], iteration_bounds = array<i64: 1>, scalar_prefetch = 0 : i64, scratch_operands = 0 : i64, tpu.core_type = #tpu.core_type<tc>, window_params = [{transform_indices = @transform_0, window_bounds = array<i64: 8, 24>}, {pipeline_mode = #tpu.pipeline_mode<synchronous>, transform_indices = @transform_1, window_bounds = array<i64: 256, 128>}, {pipeline_mode = #tpu.pipeline_mode<synchronous>, transform_indices = @transform_2, window_bounds = array<i64: 1, 128>}, {pipeline_mode = #tpu.pipeline_mode<synchronous>, transform_indices = @transform_3, window_bounds = array<i64: 1, 128>}, {transform_indices = @transform_4, window_bounds = array<i64: 1, 1>}, {transform_indices = @transform_5, window_bounds = array<i64: 8, 128>}]} {
    %c0 = arith.constant 0 : index
    %c0_0 = arith.constant 0 : index
    %0 = vector.load %arg1[%c0, %c0_0] : memref<8x24xi32, #tpu.memory_space<vmem>>, vector<8x24xi32>
    %1 = tpu.iota {dimensions = array<i32: 1>} : vector<8x128xi32>
    %cst = arith.constant 0.000000e+00 : f32
    %2 = vector.broadcast %cst : f32 to vector<8x128xf32>
    %3 = vector.extract_strided_slice %0 {offsets = [0, 0], sizes = [8, 1], strides = [1, 1]} : vector<8x24xi32> to vector<8x1xi32>
    %4 = vector.broadcast %3 : vector<8x1xi32> to vector<8x128xi32>
    %5 = arith.cmpi eq, %4, %1 : vector<8x128xi32>
    %6 = arith.extui %5 : vector<8x128xi1> to vector<8x128xi32>
    %7 = arith.sitofp %6 : vector<8x128xi32> to vector<8x128xf32>
    %8 = arith.addf %2, %7 : vector<8x128xf32>
    %9 = vector.extract_strided_slice %0 {offsets = [0, 1], sizes = [8, 1], strides = [1, 1]} : vector<8x24xi32> to vector<8x1xi32>
    %10 = vector.broadcast %9 : vector<8x1xi32> to vector<8x128xi32>
    %11 = arith.cmpi eq, %10, %1 : vector<8x128xi32>
    %12 = arith.extui %11 : vector<8x128xi1> to vector<8x128xi32>
    %13 = arith.sitofp %12 : vector<8x128xi32> to vector<8x128xf32>
    %14 = arith.addf %8, %13 : vector<8x128xf32>
    %15 = vector.extract_strided_slice %0 {offsets = [0, 2], sizes = [8, 1], strides = [1, 1]} : vector<8x24xi32> to vector<8x1xi32>
    %16 = vector.broadcast %15 : vector<8x1xi32> to vector<8x128xi32>
    %17 = arith.cmpi eq, %16, %1 : vector<8x128xi32>
    %18 = arith.extui %17 : vector<8x128xi1> to vector<8x128xi32>
    %19 = arith.sitofp %18 : vector<8x128xi32> to vector<8x128xf32>
    %20 = arith.addf %14, %19 : vector<8x128xf32>
    %21 = vector.extract_strided_slice %0 {offsets = [0, 3], sizes = [8, 1], strides = [1, 1]} : vector<8x24xi32> to vector<8x1xi32>
    %22 = vector.broadcast %21 : vector<8x1xi32> to vector<8x128xi32>
    %23 = arith.cmpi eq, %22, %1 : vector<8x128xi32>
    %24 = arith.extui %23 : vector<8x128xi1> to vector<8x128xi32>
    %25 = arith.sitofp %24 : vector<8x128xi32> to vector<8x128xf32>
    %26 = arith.addf %20, %25 : vector<8x128xf32>
    %27 = vector.extract_strided_slice %0 {offsets = [0, 4], sizes = [8, 1], strides = [1, 1]} : vector<8x24xi32> to vector<8x1xi32>
    %28 = vector.broadcast %27 : vector<8x1xi32> to vector<8x128xi32>
    %29 = arith.cmpi eq, %28, %1 : vector<8x128xi32>
    %30 = arith.extui %29 : vector<8x128xi1> to vector<8x128xi32>
    %31 = arith.sitofp %30 : vector<8x128xi32> to vector<8x128xf32>
    %32 = arith.addf %26, %31 : vector<8x128xf32>
    %33 = vector.extract_strided_slice %0 {offsets = [0, 5], sizes = [8, 1], strides = [1, 1]} : vector<8x24xi32> to vector<8x1xi32>
    %34 = vector.broadcast %33 : vector<8x1xi32> to vector<8x128xi32>
    %35 = arith.cmpi eq, %34, %1 : vector<8x128xi32>
    %36 = arith.extui %35 : vector<8x128xi1> to vector<8x128xi32>
    %37 = arith.sitofp %36 : vector<8x128xi32> to vector<8x128xf32>
    %38 = arith.addf %32, %37 : vector<8x128xf32>
    %39 = vector.extract_strided_slice %0 {offsets = [0, 6], sizes = [8, 1], strides = [1, 1]} : vector<8x24xi32> to vector<8x1xi32>
    %40 = vector.broadcast %39 : vector<8x1xi32> to vector<8x128xi32>
    %41 = arith.cmpi eq, %40, %1 : vector<8x128xi32>
    %42 = arith.extui %41 : vector<8x128xi1> to vector<8x128xi32>
    %43 = arith.sitofp %42 : vector<8x128xi32> to vector<8x128xf32>
    %44 = arith.addf %38, %43 : vector<8x128xf32>
    %45 = vector.extract_strided_slice %0 {offsets = [0, 7], sizes = [8, 1], strides = [1, 1]} : vector<8x24xi32> to vector<8x1xi32>
    %46 = vector.broadcast %45 : vector<8x1xi32> to vector<8x128xi32>
    %47 = arith.cmpi eq, %46, %1 : vector<8x128xi32>
    %48 = arith.extui %47 : vector<8x128xi1> to vector<8x128xi32>
    %49 = arith.sitofp %48 : vector<8x128xi32> to vector<8x128xf32>
    %50 = arith.addf %44, %49 : vector<8x128xf32>
    %51 = vector.extract_strided_slice %0 {offsets = [0, 8], sizes = [8, 1], strides = [1, 1]} : vector<8x24xi32> to vector<8x1xi32>
    %52 = vector.broadcast %51 : vector<8x1xi32> to vector<8x128xi32>
    %53 = arith.cmpi eq, %52, %1 : vector<8x128xi32>
    %54 = arith.extui %53 : vector<8x128xi1> to vector<8x128xi32>
    %55 = arith.sitofp %54 : vector<8x128xi32> to vector<8x128xf32>
    %56 = arith.addf %50, %55 : vector<8x128xf32>
    %57 = vector.extract_strided_slice %0 {offsets = [0, 9], sizes = [8, 1], strides = [1, 1]} : vector<8x24xi32> to vector<8x1xi32>
    %58 = vector.broadcast %57 : vector<8x1xi32> to vector<8x128xi32>
    %59 = arith.cmpi eq, %58, %1 : vector<8x128xi32>
    %60 = arith.extui %59 : vector<8x128xi1> to vector<8x128xi32>
    %61 = arith.sitofp %60 : vector<8x128xi32> to vector<8x128xf32>
    %62 = arith.addf %56, %61 : vector<8x128xf32>
    %63 = vector.extract_strided_slice %0 {offsets = [0, 10], sizes = [8, 1], strides = [1, 1]} : vector<8x24xi32> to vector<8x1xi32>
    %64 = vector.broadcast %63 : vector<8x1xi32> to vector<8x128xi32>
    %65 = arith.cmpi eq, %64, %1 : vector<8x128xi32>
    %66 = arith.extui %65 : vector<8x128xi1> to vector<8x128xi32>
    %67 = arith.sitofp %66 : vector<8x128xi32> to vector<8x128xf32>
    %68 = arith.addf %62, %67 : vector<8x128xf32>
    %69 = vector.extract_strided_slice %0 {offsets = [0, 11], sizes = [8, 1], strides = [1, 1]} : vector<8x24xi32> to vector<8x1xi32>
    %70 = vector.broadcast %69 : vector<8x1xi32> to vector<8x128xi32>
    %71 = arith.cmpi eq, %70, %1 : vector<8x128xi32>
    %72 = arith.extui %71 : vector<8x128xi1> to vector<8x128xi32>
    %73 = arith.sitofp %72 : vector<8x128xi32> to vector<8x128xf32>
    %74 = arith.addf %68, %73 : vector<8x128xf32>
    %75 = vector.extract_strided_slice %0 {offsets = [0, 12], sizes = [8, 1], strides = [1, 1]} : vector<8x24xi32> to vector<8x1xi32>
    %76 = vector.broadcast %75 : vector<8x1xi32> to vector<8x128xi32>
    %77 = arith.cmpi eq, %76, %1 : vector<8x128xi32>
    %78 = arith.extui %77 : vector<8x128xi1> to vector<8x128xi32>
    %79 = arith.sitofp %78 : vector<8x128xi32> to vector<8x128xf32>
    %80 = arith.addf %74, %79 : vector<8x128xf32>
    %81 = vector.extract_strided_slice %0 {offsets = [0, 13], sizes = [8, 1], strides = [1, 1]} : vector<8x24xi32> to vector<8x1xi32>
    %82 = vector.broadcast %81 : vector<8x1xi32> to vector<8x128xi32>
    %83 = arith.cmpi eq, %82, %1 : vector<8x128xi32>
    %84 = arith.extui %83 : vector<8x128xi1> to vector<8x128xi32>
    %85 = arith.sitofp %84 : vector<8x128xi32> to vector<8x128xf32>
    %86 = arith.addf %80, %85 : vector<8x128xf32>
    %87 = vector.extract_strided_slice %0 {offsets = [0, 14], sizes = [8, 1], strides = [1, 1]} : vector<8x24xi32> to vector<8x1xi32>
    %88 = vector.broadcast %87 : vector<8x1xi32> to vector<8x128xi32>
    %89 = arith.cmpi eq, %88, %1 : vector<8x128xi32>
    %90 = arith.extui %89 : vector<8x128xi1> to vector<8x128xi32>
    %91 = arith.sitofp %90 : vector<8x128xi32> to vector<8x128xf32>
    %92 = arith.addf %86, %91 : vector<8x128xf32>
    %93 = vector.extract_strided_slice %0 {offsets = [0, 15], sizes = [8, 1], strides = [1, 1]} : vector<8x24xi32> to vector<8x1xi32>
    %94 = vector.broadcast %93 : vector<8x1xi32> to vector<8x128xi32>
    %95 = arith.cmpi eq, %94, %1 : vector<8x128xi32>
    %96 = arith.extui %95 : vector<8x128xi1> to vector<8x128xi32>
    %97 = arith.sitofp %96 : vector<8x128xi32> to vector<8x128xf32>
    %98 = arith.addf %92, %97 : vector<8x128xf32>
    %cst_1 = arith.constant 0.000000e+00 : f32
    %99 = vector.broadcast %cst_1 : f32 to vector<8x128xf32>
    %100 = vector.extract_strided_slice %0 {offsets = [0, 16], sizes = [8, 1], strides = [1, 1]} : vector<8x24xi32> to vector<8x1xi32>
    %101 = vector.broadcast %100 : vector<8x1xi32> to vector<8x128xi32>
    %102 = arith.cmpi eq, %101, %1 : vector<8x128xi32>
    %103 = arith.extui %102 : vector<8x128xi1> to vector<8x128xi32>
    %104 = arith.sitofp %103 : vector<8x128xi32> to vector<8x128xf32>
    %105 = arith.addf %99, %104 : vector<8x128xf32>
    %106 = vector.extract_strided_slice %0 {offsets = [0, 17], sizes = [8, 1], strides = [1, 1]} : vector<8x24xi32> to vector<8x1xi32>
    %107 = vector.broadcast %106 : vector<8x1xi32> to vector<8x128xi32>
    %108 = arith.cmpi eq, %107, %1 : vector<8x128xi32>
    %109 = arith.extui %108 : vector<8x128xi1> to vector<8x128xi32>
    %110 = arith.sitofp %109 : vector<8x128xi32> to vector<8x128xf32>
    %111 = arith.addf %105, %110 : vector<8x128xf32>
    %112 = vector.extract_strided_slice %0 {offsets = [0, 18], sizes = [8, 1], strides = [1, 1]} : vector<8x24xi32> to vector<8x1xi32>
    %113 = vector.broadcast %112 : vector<8x1xi32> to vector<8x128xi32>
    %114 = arith.cmpi eq, %113, %1 : vector<8x128xi32>
    %115 = arith.extui %114 : vector<8x128xi1> to vector<8x128xi32>
    %116 = arith.sitofp %115 : vector<8x128xi32> to vector<8x128xf32>
    %117 = arith.addf %111, %116 : vector<8x128xf32>
    %118 = vector.extract_strided_slice %0 {offsets = [0, 19], sizes = [8, 1], strides = [1, 1]} : vector<8x24xi32> to vector<8x1xi32>
    %119 = vector.broadcast %118 : vector<8x1xi32> to vector<8x128xi32>
    %120 = arith.cmpi eq, %119, %1 : vector<8x128xi32>
    %121 = arith.extui %120 : vector<8x128xi1> to vector<8x128xi32>
    %122 = arith.sitofp %121 : vector<8x128xi32> to vector<8x128xf32>
    %123 = arith.addf %117, %122 : vector<8x128xf32>
    %124 = vector.extract_strided_slice %0 {offsets = [0, 20], sizes = [8, 1], strides = [1, 1]} : vector<8x24xi32> to vector<8x1xi32>
    %125 = vector.broadcast %124 : vector<8x1xi32> to vector<8x128xi32>
    %126 = arith.cmpi eq, %125, %1 : vector<8x128xi32>
    %127 = arith.extui %126 : vector<8x128xi1> to vector<8x128xi32>
    %128 = arith.sitofp %127 : vector<8x128xi32> to vector<8x128xf32>
    %129 = arith.addf %123, %128 : vector<8x128xf32>
    %130 = vector.extract_strided_slice %0 {offsets = [0, 21], sizes = [8, 1], strides = [1, 1]} : vector<8x24xi32> to vector<8x1xi32>
    %131 = vector.broadcast %130 : vector<8x1xi32> to vector<8x128xi32>
    %132 = arith.cmpi eq, %131, %1 : vector<8x128xi32>
    %133 = arith.extui %132 : vector<8x128xi1> to vector<8x128xi32>
    %134 = arith.sitofp %133 : vector<8x128xi32> to vector<8x128xf32>
    %135 = arith.addf %129, %134 : vector<8x128xf32>
    %136 = vector.extract_strided_slice %0 {offsets = [0, 22], sizes = [8, 1], strides = [1, 1]} : vector<8x24xi32> to vector<8x1xi32>
    %137 = vector.broadcast %136 : vector<8x1xi32> to vector<8x128xi32>
    %138 = arith.cmpi eq, %137, %1 : vector<8x128xi32>
    %139 = arith.extui %138 : vector<8x128xi1> to vector<8x128xi32>
    %140 = arith.sitofp %139 : vector<8x128xi32> to vector<8x128xf32>
    %141 = arith.addf %135, %140 : vector<8x128xf32>
    %142 = vector.extract_strided_slice %0 {offsets = [0, 23], sizes = [8, 1], strides = [1, 1]} : vector<8x24xi32> to vector<8x1xi32>
    %143 = vector.broadcast %142 : vector<8x1xi32> to vector<8x128xi32>
    %144 = arith.cmpi eq, %143, %1 : vector<8x128xi32>
    %145 = arith.extui %144 : vector<8x128xi1> to vector<8x128xi32>
    %146 = arith.sitofp %145 : vector<8x128xi32> to vector<8x128xf32>
    %147 = arith.addf %141, %146 : vector<8x128xf32>
    %148 = tpu.concatenate %98, %147 in 1 : vector<8x128xf32>, vector<8x128xf32> -> vector<8x256xf32>
    %149 = arith.truncf %148 : vector<8x256xf32> to vector<8x256xbf16>
    %c0_2 = arith.constant 0 : index
    %c0_3 = arith.constant 0 : index
    %150 = vector.load %arg2[%c0_2, %c0_3] : memref<256x128xbf16, #tpu.memory_space<vmem>>, vector<256x128xbf16>
    %cst_4 = arith.constant dense<0.000000e+00> : vector<8x128xf32>
    %151 = tpu.matmul %149, %150, %cst_4 {dimension_numbers = #tpu.dot_dimension_numbers<[1], [0], [0], [1], [0, 0, 1, 1], [], []>} : vector<8x256xbf16>, vector<256x128xbf16>, vector<8x128xf32> -> vector<8x128xf32>
    %c0_5 = arith.constant 0 : index
    %c0_6 = arith.constant 0 : index
    %152 = vector.load %arg3[%c0_5, %c0_6] : memref<1x128xf32, #tpu.memory_space<vmem>>, vector<1x128xf32>
    %153 = vector.broadcast %152 : vector<1x128xf32> to vector<8x128xf32>
    %154 = arith.addf %151, %153 : vector<8x128xf32>
    %cst_7 = arith.constant 0.000000e+00 : f32
    %155 = vector.broadcast %cst_7 : f32 to vector<8x128xf32>
    %156 = arith.maximumf %154, %155 : vector<8x128xf32>
    %c0_8 = arith.constant 0 : index
    %c0_9 = arith.constant 0 : index
    %157 = vector.load %arg4[%c0_8, %c0_9] : memref<1x128xf32, #tpu.memory_space<vmem>>, vector<1x128xf32>
    %158 = vector.broadcast %157 : vector<1x128xf32> to vector<8x128xf32>
    %159 = arith.mulf %156, %158 : vector<8x128xf32>
    %cst_10 = arith.constant dense<0.000000e+00> : vector<8xf32>
    %160 = vector.multi_reduction <add>, %159, %cst_10 [1] : vector<8x128xf32> to vector<8xf32>
    %161 = vector.shape_cast %160 : vector<8xf32> to vector<8x1xf32>
    %c0_11 = arith.constant 0 : index
    %c0_12 = arith.constant 0 : index
    %162 = memref.load %arg5[%c0_11, %c0_12] : memref<1x1xf32, #tpu.memory_space<smem>>
    %163 = vector.broadcast %162 : f32 to vector<8x1xf32>
    %164 = arith.addf %161, %163 : vector<8x1xf32>
    %cst_13 = arith.constant 0.000000e+00 : f32
    %165 = vector.broadcast %cst_13 : f32 to vector<8x1xf32>
    %166 = arith.subf %165, %164 : vector<8x1xf32>
    %167 = math.exp %166 : vector<8x1xf32>
    %cst_14 = arith.constant 1.000000e+00 : f32
    %168 = vector.broadcast %cst_14 : f32 to vector<8x1xf32>
    %169 = arith.addf %168, %167 : vector<8x1xf32>
    %170 = tpu.reciprocal %169 {approx = true} : vector<8x1xf32> -> vector<8x1xf32>
    %171 = vector.shape_cast %170 : vector<8x1xf32> to vector<8x1xf32>
    %172 = vector.broadcast %171 : vector<8x1xf32> to vector<8x128xf32>
    %c0_15 = arith.constant 0 : index
    %c0_16 = arith.constant 0 : index
    %173 = vector.load %arg6[%c0_15, %c0_16] : memref<8x128xf32, #tpu.memory_space<vmem>>, vector<8x128xf32>
    tpu.vector_store %arg6[%c0_15, %c0_16], %172 {strides = array<i32>} : memref<8x128xf32, #tpu.memory_space<vmem>>, vector<8x128xf32>,
    return
  }
  func.func @transform_0(%arg0: i32) -> (i32, i32) {
    %c0_i32 = arith.constant 0 : i32
    %c0_i32_0 = arith.constant 0 : i32
    return %arg0, %c0_i32 : i32, i32
  }
  func.func @transform_1(%arg0: i32) -> (i32, i32) {
    %c0_i32 = arith.constant 0 : i32
    %c0_i32_0 = arith.constant 0 : i32
    %c0_i32_1 = arith.constant 0 : i32
    return %c0_i32, %c0_i32_0 : i32, i32
  }
  func.func @transform_2(%arg0: i32) -> (i32, i32) {
    %c0_i32 = arith.constant 0 : i32
    %c0_i32_0 = arith.constant 0 : i32
    %c0_i32_1 = arith.constant 0 : i32
    return %c0_i32, %c0_i32_0 : i32, i32
  }
  func.func @transform_3(%arg0: i32) -> (i32, i32) {
    %c0_i32 = arith.constant 0 : i32
    %c0_i32_0 = arith.constant 0 : i32
    %c0_i32_1 = arith.constant 0 : i32
    return %c0_i32, %c0_i32_0 : i32, i32
  }
  func.func @transform_4(%arg0: i32) -> (i32, i32) {
    %c0_i32 = arith.constant 0 : i32
    %c0_i32_0 = arith.constant 0 : i32
    %c0_i32_1 = arith.constant 0 : i32
    return %c0_i32, %c0_i32_0 : i32, i32
  }
  func.func @transform_5(%arg0: i32) -> (i32, i32) {
    %c0_i32 = arith.constant 0 : i32
    %c0_i32_0 = arith.constant 0 : i32
    return %arg0, %c0_i32 : i32, i32
  }
}

module attributes {stable_mosaic.version = 11 : i64} {
  func.func @_q_value_kernel(%arg0: i32, %arg1: memref<8x24xi32, #tpu.memory_space<vmem>>, %arg2: memref<256x128xbf16, #tpu.memory_space<vmem>>, %arg3: memref<1x128xf32, #tpu.memory_space<vmem>>, %arg4: memref<1x128xf32, #tpu.memory_space<vmem>>, %arg5: memref<1x1xf32, #tpu.memory_space<smem>>, %arg6: memref<8x128xf32, #tpu.memory_space<vmem>>) attributes {dimension_semantics = [#tpu.dimension_semantics<parallel>], iteration_bounds = array<i64: 1>, scalar_prefetch = 0 : i64, scratch_operands = 0 : i64, tpu.core_type = #tpu.core_type<tc>, window_params = [{transform_indices = @transform_0, window_bounds = array<i64: 8, 24>}, {pipeline_mode = #tpu.pipeline_mode<synchronous>, transform_indices = @transform_1, window_bounds = array<i64: 256, 128>}, {pipeline_mode = #tpu.pipeline_mode<synchronous>, transform_indices = @transform_2, window_bounds = array<i64: 1, 128>}, {pipeline_mode = #tpu.pipeline_mode<synchronous>, transform_indices = @transform_3, window_bounds = array<i64: 1, 128>}, {transform_indices = @transform_4, window_bounds = array<i64: 1, 1>}, {transform_indices = @transform_5, window_bounds = array<i64: 8, 128>}]} {
    %c0 = arith.constant 0 : index
    %c0_0 = arith.constant 0 : index
    %0 = vector.load %arg1[%c0, %c0_0] : memref<8x24xi32, #tpu.memory_space<vmem>>, vector<8x24xi32>
    %1 = tpu.iota {dimensions = array<i32: 1>} : vector<8x128xi32>
    %cst = arith.constant 0.000000e+00 : f32
    %2 = vector.broadcast %cst : f32 to vector<8x128xf32>
    %3 = vector.extract_strided_slice %0 {offsets = [0, 0], sizes = [8, 1], strides = [1, 1]} : vector<8x24xi32> to vector<8x1xi32>
    %4 = vector.broadcast %3 : vector<8x1xi32> to vector<8x128xi32>
    %5 = arith.cmpi eq, %4, %1 : vector<8x128xi32>
    %6 = arith.extui %5 : vector<8x128xi1> to vector<8x128xi32>
    %7 = arith.sitofp %6 : vector<8x128xi32> to vector<8x128xf32>
    %8 = arith.addf %2, %7 : vector<8x128xf32>
    %9 = vector.extract_strided_slice %0 {offsets = [0, 1], sizes = [8, 1], strides = [1, 1]} : vector<8x24xi32> to vector<8x1xi32>
    %10 = vector.broadcast %9 : vector<8x1xi32> to vector<8x128xi32>
    %11 = arith.cmpi eq, %10, %1 : vector<8x128xi32>
    %12 = arith.extui %11 : vector<8x128xi1> to vector<8x128xi32>
    %13 = arith.sitofp %12 : vector<8x128xi32> to vector<8x128xf32>
    %14 = arith.addf %8, %13 : vector<8x128xf32>
    %15 = vector.extract_strided_slice %0 {offsets = [0, 2], sizes = [8, 1], strides = [1, 1]} : vector<8x24xi32> to vector<8x1xi32>
    %16 = vector.broadcast %15 : vector<8x1xi32> to vector<8x128xi32>
    %17 = arith.cmpi eq, %16, %1 : vector<8x128xi32>
    %18 = arith.extui %17 : vector<8x128xi1> to vector<8x128xi32>
    %19 = arith.sitofp %18 : vector<8x128xi32> to vector<8x128xf32>
    %20 = arith.addf %14, %19 : vector<8x128xf32>
    %21 = vector.extract_strided_slice %0 {offsets = [0, 3], sizes = [8, 1], strides = [1, 1]} : vector<8x24xi32> to vector<8x1xi32>
    %22 = vector.broadcast %21 : vector<8x1xi32> to vector<8x128xi32>
    %23 = arith.cmpi eq, %22, %1 : vector<8x128xi32>
    %24 = arith.extui %23 : vector<8x128xi1> to vector<8x128xi32>
    %25 = arith.sitofp %24 : vector<8x128xi32> to vector<8x128xf32>
    %26 = arith.addf %20, %25 : vector<8x128xf32>
    %27 = vector.extract_strided_slice %0 {offsets = [0, 4], sizes = [8, 1], strides = [1, 1]} : vector<8x24xi32> to vector<8x1xi32>
    %28 = vector.broadcast %27 : vector<8x1xi32> to vector<8x128xi32>
    %29 = arith.cmpi eq, %28, %1 : vector<8x128xi32>
    %30 = arith.extui %29 : vector<8x128xi1> to vector<8x128xi32>
    %31 = arith.sitofp %30 : vector<8x128xi32> to vector<8x128xf32>
    %32 = arith.addf %26, %31 : vector<8x128xf32>
    %33 = vector.extract_strided_slice %0 {offsets = [0, 5], sizes = [8, 1], strides = [1, 1]} : vector<8x24xi32> to vector<8x1xi32>
    %34 = vector.broadcast %33 : vector<8x1xi32> to vector<8x128xi32>
    %35 = arith.cmpi eq, %34, %1 : vector<8x128xi32>
    %36 = arith.extui %35 : vector<8x128xi1> to vector<8x128xi32>
    %37 = arith.sitofp %36 : vector<8x128xi32> to vector<8x128xf32>
    %38 = arith.addf %32, %37 : vector<8x128xf32>
    %39 = vector.extract_strided_slice %0 {offsets = [0, 6], sizes = [8, 1], strides = [1, 1]} : vector<8x24xi32> to vector<8x1xi32>
    %40 = vector.broadcast %39 : vector<8x1xi32> to vector<8x128xi32>
    %41 = arith.cmpi eq, %40, %1 : vector<8x128xi32>
    %42 = arith.extui %41 : vector<8x128xi1> to vector<8x128xi32>
    %43 = arith.sitofp %42 : vector<8x128xi32> to vector<8x128xf32>
    %44 = arith.addf %38, %43 : vector<8x128xf32>
    %45 = vector.extract_strided_slice %0 {offsets = [0, 7], sizes = [8, 1], strides = [1, 1]} : vector<8x24xi32> to vector<8x1xi32>
    %46 = vector.broadcast %45 : vector<8x1xi32> to vector<8x128xi32>
    %47 = arith.cmpi eq, %46, %1 : vector<8x128xi32>
    %48 = arith.extui %47 : vector<8x128xi1> to vector<8x128xi32>
    %49 = arith.sitofp %48 : vector<8x128xi32> to vector<8x128xf32>
    %50 = arith.addf %44, %49 : vector<8x128xf32>
    %51 = vector.extract_strided_slice %0 {offsets = [0, 8], sizes = [8, 1], strides = [1, 1]} : vector<8x24xi32> to vector<8x1xi32>
    %52 = vector.broadcast %51 : vector<8x1xi32> to vector<8x128xi32>
    %53 = arith.cmpi eq, %52, %1 : vector<8x128xi32>
    %54 = arith.extui %53 : vector<8x128xi1> to vector<8x128xi32>
    %55 = arith.sitofp %54 : vector<8x128xi32> to vector<8x128xf32>
    %56 = arith.addf %50, %55 : vector<8x128xf32>
    %57 = vector.extract_strided_slice %0 {offsets = [0, 9], sizes = [8, 1], strides = [1, 1]} : vector<8x24xi32> to vector<8x1xi32>
    %58 = vector.broadcast %57 : vector<8x1xi32> to vector<8x128xi32>
    %59 = arith.cmpi eq, %58, %1 : vector<8x128xi32>
    %60 = arith.extui %59 : vector<8x128xi1> to vector<8x128xi32>
    %61 = arith.sitofp %60 : vector<8x128xi32> to vector<8x128xf32>
    %62 = arith.addf %56, %61 : vector<8x128xf32>
    %63 = vector.extract_strided_slice %0 {offsets = [0, 10], sizes = [8, 1], strides = [1, 1]} : vector<8x24xi32> to vector<8x1xi32>
    %64 = vector.broadcast %63 : vector<8x1xi32> to vector<8x128xi32>
    %65 = arith.cmpi eq, %64, %1 : vector<8x128xi32>
    %66 = arith.extui %65 : vector<8x128xi1> to vector<8x128xi32>
    %67 = arith.sitofp %66 : vector<8x128xi32> to vector<8x128xf32>
    %68 = arith.addf %62, %67 : vector<8x128xf32>
    %69 = vector.extract_strided_slice %0 {offsets = [0, 11], sizes = [8, 1], strides = [1, 1]} : vector<8x24xi32> to vector<8x1xi32>
    %70 = vector.broadcast %69 : vector<8x1xi32> to vector<8x128xi32>
    %71 = arith.cmpi eq, %70, %1 : vector<8x128xi32>
    %72 = arith.extui %71 : vector<8x128xi1> to vector<8x128xi32>
    %73 = arith.sitofp %72 : vector<8x128xi32> to vector<8x128xf32>
    %74 = arith.addf %68, %73 : vector<8x128xf32>
    %75 = vector.extract_strided_slice %0 {offsets = [0, 12], sizes = [8, 1], strides = [1, 1]} : vector<8x24xi32> to vector<8x1xi32>
    %76 = vector.broadcast %75 : vector<8x1xi32> to vector<8x128xi32>
    %77 = arith.cmpi eq, %76, %1 : vector<8x128xi32>
    %78 = arith.extui %77 : vector<8x128xi1> to vector<8x128xi32>
    %79 = arith.sitofp %78 : vector<8x128xi32> to vector<8x128xf32>
    %80 = arith.addf %74, %79 : vector<8x128xf32>
    %81 = vector.extract_strided_slice %0 {offsets = [0, 13], sizes = [8, 1], strides = [1, 1]} : vector<8x24xi32> to vector<8x1xi32>
    %82 = vector.broadcast %81 : vector<8x1xi32> to vector<8x128xi32>
    %83 = arith.cmpi eq, %82, %1 : vector<8x128xi32>
    %84 = arith.extui %83 : vector<8x128xi1> to vector<8x128xi32>
    %85 = arith.sitofp %84 : vector<8x128xi32> to vector<8x128xf32>
    %86 = arith.addf %80, %85 : vector<8x128xf32>
    %87 = vector.extract_strided_slice %0 {offsets = [0, 14], sizes = [8, 1], strides = [1, 1]} : vector<8x24xi32> to vector<8x1xi32>
    %88 = vector.broadcast %87 : vector<8x1xi32> to vector<8x128xi32>
    %89 = arith.cmpi eq, %88, %1 : vector<8x128xi32>
    %90 = arith.extui %89 : vector<8x128xi1> to vector<8x128xi32>
    %91 = arith.sitofp %90 : vector<8x128xi32> to vector<8x128xf32>
    %92 = arith.addf %86, %91 : vector<8x128xf32>
    %93 = vector.extract_strided_slice %0 {offsets = [0, 15], sizes = [8, 1], strides = [1, 1]} : vector<8x24xi32> to vector<8x1xi32>
    %94 = vector.broadcast %93 : vector<8x1xi32> to vector<8x128xi32>
    %95 = arith.cmpi eq, %94, %1 : vector<8x128xi32>
    %96 = arith.extui %95 : vector<8x128xi1> to vector<8x128xi32>
    %97 = arith.sitofp %96 : vector<8x128xi32> to vector<8x128xf32>
    %98 = arith.addf %92, %97 : vector<8x128xf32>
    %cst_1 = arith.constant 0.000000e+00 : f32
    %99 = vector.broadcast %cst_1 : f32 to vector<8x128xf32>
    %100 = vector.extract_strided_slice %0 {offsets = [0, 16], sizes = [8, 1], strides = [1, 1]} : vector<8x24xi32> to vector<8x1xi32>
    %101 = vector.broadcast %100 : vector<8x1xi32> to vector<8x128xi32>
    %102 = arith.cmpi eq, %101, %1 : vector<8x128xi32>
    %103 = arith.extui %102 : vector<8x128xi1> to vector<8x128xi32>
    %104 = arith.sitofp %103 : vector<8x128xi32> to vector<8x128xf32>
    %105 = arith.addf %99, %104 : vector<8x128xf32>
    %106 = vector.extract_strided_slice %0 {offsets = [0, 17], sizes = [8, 1], strides = [1, 1]} : vector<8x24xi32> to vector<8x1xi32>
    %107 = vector.broadcast %106 : vector<8x1xi32> to vector<8x128xi32>
    %108 = arith.cmpi eq, %107, %1 : vector<8x128xi32>
    %109 = arith.extui %108 : vector<8x128xi1> to vector<8x128xi32>
    %110 = arith.sitofp %109 : vector<8x128xi32> to vector<8x128xf32>
    %111 = arith.addf %105, %110 : vector<8x128xf32>
    %112 = vector.extract_strided_slice %0 {offsets = [0, 18], sizes = [8, 1], strides = [1, 1]} : vector<8x24xi32> to vector<8x1xi32>
    %113 = vector.broadcast %112 : vector<8x1xi32> to vector<8x128xi32>
    %114 = arith.cmpi eq, %113, %1 : vector<8x128xi32>
    %115 = arith.extui %114 : vector<8x128xi1> to vector<8x128xi32>
    %116 = arith.sitofp %115 : vector<8x128xi32> to vector<8x128xf32>
    %117 = arith.addf %111, %116 : vector<8x128xf32>
    %118 = vector.extract_strided_slice %0 {offsets = [0, 19], sizes = [8, 1], strides = [1, 1]} : vector<8x24xi32> to vector<8x1xi32>
    %119 = vector.broadcast %118 : vector<8x1xi32> to vector<8x128xi32>
    %120 = arith.cmpi eq, %119, %1 : vector<8x128xi32>
    %121 = arith.extui %120 : vector<8x128xi1> to vector<8x128xi32>
    %122 = arith.sitofp %121 : vector<8x128xi32> to vector<8x128xf32>
    %123 = arith.addf %117, %122 : vector<8x128xf32>
    %124 = vector.extract_strided_slice %0 {offsets = [0, 20], sizes = [8, 1], strides = [1, 1]} : vector<8x24xi32> to vector<8x1xi32>
    %125 = vector.broadcast %124 : vector<8x1xi32> to vector<8x128xi32>
    %126 = arith.cmpi eq, %125, %1 : vector<8x128xi32>
    %127 = arith.extui %126 : vector<8x128xi1> to vector<8x128xi32>
    %128 = arith.sitofp %127 : vector<8x128xi32> to vector<8x128xf32>
    %129 = arith.addf %123, %128 : vector<8x128xf32>
    %130 = vector.extract_strided_slice %0 {offsets = [0, 21], sizes = [8, 1], strides = [1, 1]} : vector<8x24xi32> to vector<8x1xi32>
    %131 = vector.broadcast %130 : vector<8x1xi32> to vector<8x128xi32>
    %132 = arith.cmpi eq, %131, %1 : vector<8x128xi32>
    %133 = arith.extui %132 : vector<8x128xi1> to vector<8x128xi32>
    %134 = arith.sitofp %133 : vector<8x128xi32> to vector<8x128xf32>
    %135 = arith.addf %129, %134 : vector<8x128xf32>
    %136 = vector.extract_strided_slice %0 {offsets = [0, 22], sizes = [8, 1], strides = [1, 1]} : vector<8x24xi32> to vector<8x1xi32>
    %137 = vector.broadcast %136 : vector<8x1xi32> to vector<8x128xi32>
    %138 = arith.cmpi eq, %137, %1 : vector<8x128xi32>
    %139 = arith.extui %138 : vector<8x128xi1> to vector<8x128xi32>
    %140 = arith.sitofp %139 : vector<8x128xi32> to vector<8x128xf32>
    %141 = arith.addf %135, %140 : vector<8x128xf32>
    %142 = vector.extract_strided_slice %0 {offsets = [0, 23], sizes = [8, 1], strides = [1, 1]} : vector<8x24xi32> to vector<8x1xi32>
    %143 = vector.broadcast %142 : vector<8x1xi32> to vector<8x128xi32>
    %144 = arith.cmpi eq, %143, %1 : vector<8x128xi32>
    %145 = arith.extui %144 : vector<8x128xi1> to vector<8x128xi32>
    %146 = arith.sitofp %145 : vector<8x128xi32> to vector<8x128xf32>
    %147 = arith.addf %141, %146 : vector<8x128xf32>
    %148 = tpu.concatenate %98, %147 in 1 : vector<8x128xf32>, vector<8x128xf32> -> vector<8x256xf32>
    %149 = arith.truncf %148 : vector<8x256xf32> to vector<8x256xbf16>
    %c0_2 = arith.constant 0 : index
    %c0_3 = arith.constant 0 : index
    %150 = vector.load %arg2[%c0_2, %c0_3] : memref<256x128xbf16, #tpu.memory_space<vmem>>, vector<256x128xbf16>
    %cst_4 = arith.constant dense<0.000000e+00> : vector<8x128xf32>
    %151 = tpu.matmul %149, %150, %cst_4 {dimension_numbers = #tpu.dot_dimension_numbers<[1], [0], [0], [1], [0, 0, 1, 1], [], []>} : vector<8x256xbf16>, vector<256x128xbf16>, vector<8x128xf32> -> vector<8x128xf32>
    %c0_5 = arith.constant 0 : index
    %c0_6 = arith.constant 0 : index
    %152 = vector.load %arg3[%c0_5, %c0_6] : memref<1x128xf32, #tpu.memory_space<vmem>>, vector<1x128xf32>
    %153 = vector.broadcast %152 : vector<1x128xf32> to vector<8x128xf32>
    %154 = arith.addf %151, %153 : vector<8x128xf32>
    %cst_7 = arith.constant 0.000000e+00 : f32
    %155 = vector.broadcast %cst_7 : f32 to vector<8x128xf32>
    %156 = arith.maximumf %154, %155 : vector<8x128xf32>
    %c0_8 = arith.constant 0 : index
    %c0_9 = arith.constant 0 : index
    %157 = vector.load %arg4[%c0_8, %c0_9] : memref<1x128xf32, #tpu.memory_space<vmem>>, vector<1x128xf32>
    %158 = vector.broadcast %157 : vector<1x128xf32> to vector<8x128xf32>
    %159 = arith.mulf %156, %158 : vector<8x128xf32>
    %cst_10 = arith.constant dense<0.000000e+00> : vector<8xf32>
    %160 = vector.multi_reduction <add>, %159, %cst_10 [1] : vector<8x128xf32> to vector<8xf32>
    %161 = vector.shape_cast %160 : vector<8xf32> to vector<8x1xf32>
    %c0_11 = arith.constant 0 : index
    %c0_12 = arith.constant 0 : index
    %162 = memref.load %arg5[%c0_11, %c0_12] : memref<1x1xf32, #tpu.memory_space<smem>>
    %163 = vector.broadcast %162 : f32 to vector<8x1xf32>
    %164 = arith.addf %161, %163 : vector<8x1xf32>
    %cst_13 = arith.constant 0.000000e+00 : f32
    %165 = vector.broadcast %cst_13 : f32 to vector<8x1xf32>
    %166 = arith.subf %165, %164 : vector<8x1xf32>
    %167 = math.exp %166 : vector<8x1xf32>
    %cst_14 = arith.constant 1.000000e+00 : f32
    %168 = vector.broadcast %cst_14 : f32 to vector<8x1xf32>
    %169 = arith.addf %168, %167 : vector<8x1xf32>
    %170 = tpu.reciprocal %169 {approx = true} : vector<8x1xf32> -> vector<8x1xf32>
    %171 = vector.shape_cast %170 : vector<8x1xf32> to vector<8x1xf32>
    %172 = vector.broadcast %171 : vector<8x1xf32> to vector<8x128xf32>
    %c0_15 = arith.constant 0 : index
    %c0_16 = arith.constant 0 : index
    %173 = vector.load %arg6[%c0_15, %c0_16] : memref<8x128xf32, #tpu.memory_space<vmem>>, vector<8x128xf32>
    tpu.vector_store %arg6[%c0_15, %c0_16], %172 {strides = array<i32>} : memref<8x128xf32, #tpu.memory_space<vmem>>, vector<8x128xf32>,
    return
  }
  func.func @transform_0(%arg0: i32) -> (i32, i32) {
    %c0_i32 = arith.constant 0 : i32
    %c0_i32_0 = arith.constant 0 : i32
    return %arg0, %c0_i32 : i32, i32
  }
  func.func @transform_1(%arg0: i32) -> (i32, i32) {
    %c0_i32 = arith.constant 0 : i32
    %c0_i32_0 = arith.constant 0 : i32
    %c0_i32_1 = arith.constant 0 : i32
    return %c0_i32, %c0_i32_0 : i32, i32
  }
  func.func @transform_2(%arg0: i32) -> (i32, i32) {
    %c0_i32 = arith.constant 0 : i32
    %c0_i32_0 = arith.constant 0 : i32
    %c0_i32_1 = arith.constant 0 : i32
    return %c0_i32, %c0_i32_0 : i32, i32
  }
  func.func @transform_3(%arg0: i32) -> (i32, i32) {
    %c0_i32 = arith.constant 0 : i32
    %c0_i32_0 = arith.constant 0 : i32
    %c0_i32_1 = arith.constant 0 : i32
    return %c0_i32, %c0_i32_0 : i32, i32
  }
  func.func @transform_4(%arg0: i32) -> (i32, i32) {
    %c0_i32 = arith.constant 0 : i32
    %c0_i32_0 = arith.constant 0 : i32
    %c0_i32_1 = arith.constant 0 : i32
    return %c0_i32, %c0_i32_0 : i32, i32
  }
  func.func @transform_5(%arg0: i32) -> (i32, i32) {
    %c0_i32 = arith.constant 0 : i32
    %c0_i32_0 = arith.constant 0 : i32
    return %arg0, %c0_i32 : i32, i32
  }
}

</mosaic_0001>

<llo_original>
// kernel: tpu_custom_call.1
$region0: #{tpu_custom_call.1}
  #allocation0 [shape = 'u32[]', space=smem, size = 0x4, offset = 0x4, fixed_abs, tag = 'smem constant byte address 0x4 - core index']
  #allocation1 [shape = 'u32[72,128]{1,0:T(1,128)}', space=vmem, size = 0x9000, scoped, tag = 'internal scratch']
  #allocation2 [shape = 'f32[1,1]{1,0:T(1,128)S(6)}', space=smem, size = 0x200, scoped, tag = 'scoped memory for tpu_custom_call.1']
  %s0 = inlined_call_operand.hbm [shape: s32[8,24], index: 0, kind: input, shape index: {}]
  %s1 = inlined_call_operand.hbm [shape: bf16[256,128], index: 1, kind: input, shape index: {}]
  %s2 = inlined_call_operand.vmem [shape: f32[1,128], index: 2, kind: input, shape index: {}]
  %s3 = inlined_call_operand.vmem [shape: f32[1,128], index: 3, kind: input, shape index: {}]
  %s4 = inlined_call_operand.<no memory space> [shape: f32[1,1], index: 4, kind: input, shape index: {}]
  %s5 = inlined_call_operand.hbm [shape: f32[8,128], index: 5, kind: output, shape index: {}]
  %s6 = sld [smem:[#allocation0]]
  $region38: #{tpu_custom_call.1} parent=0
    _
  %s8 = ssub.s32 1, %s6
  %s9 = scalar_select 0, %s8, %s6
  %10 = sst [smem:[#allocation2]] %s4
  $region1: #{tpu_custom_call.1} parent=0
    #allocation3 [shape = 'u8[4096]{0}', space=vmem, size = 0x1000, scoped, tag = 'input window, operand 0, single buffered']
    #allocation4 [shape = 's32[1]{0}', space=sflag, size = 0x4, scoped, tag = 'scoped memory for tpu_custom_call.1']
    #allocation5 [shape = 's32[1]{0}', space=sflag, size = 0x4, scoped, tag = 'scoped memory for tpu_custom_call.1']
    #allocation6 [shape = 'u8[65536]{0}', space=vmem, size = 0x10000, scoped, tag = 'input window, operand 1, single buffered']
    #allocation7 [shape = 's32[1]{0}', space=sflag, size = 0x4, scoped, tag = 'scoped memory for tpu_custom_call.1']
    #allocation8 [shape = 'u8[4096]{0}', space=vmem, size = 0x1000, scoped, tag = 'output window, operand 0, single buffered']
    %11 = vsyncpa [#allocation4], 0
    %12 = vsyncpa [#allocation7], 0
    %13 = vsyncpa [#allocation5], 0
    // Predicated region
    $region2: #{tpu_custom_call.1} parent=1 // pred_check
      _
    $region3: #{tpu_custom_call.1} parent=1 // pred_check_branch
      %15 = sbr.rel (0) target = $region5
    $region4: #{tpu_custom_call.1} parent=1 // pred_region
      %17 = vsyncadd [#allocation4], 0
      %s19 = sshll.u32 %s0, 4
      %s20 = int_to_ptr.hbm [resolvable:$true] %s19
      %s21 = sshll.u32 [#allocation3], 4
      %s22 = int_to_ptr.vmem [resolvable:$true] %s21
      %24 = dma.hbm_to_vmem [thread:$0]  %s20, 128, %s22, [#allocation4]
    $region5: #{tpu_custom_call.1} parent=1 // pred_fallthru
      _
    // Predicated region
    $region6: #{tpu_custom_call.1} parent=1 // pred_check
      _
    $region7: #{tpu_custom_call.1} parent=1 // pred_check_branch
      %26 = sbr.rel (0) target = $region9
    $region8: #{tpu_custom_call.1} parent=1 // pred_region
      %28 = vsyncadd [#allocation7], 0
      %s29 = sshll.u32 %s1, 4
      %s30 = int_to_ptr.hbm [resolvable:$true] %s29
      %s31 = sshll.u32 [#allocation6], 4
      %s32 = int_to_ptr.vmem [resolvable:$true] %s31
      %37 = dma.hbm_to_vmem [thread:$0]  %s30, 2048, %s32, [#allocation7], 64, 64, 4
    $region9: #{tpu_custom_call.1} parent=1 // pred_fallthru
      _
    // Predicated region
    $region10: #{tpu_custom_call.1} parent=1 // pred_check
      _
    $region11: #{tpu_custom_call.1} parent=1 // pred_check_branch
      %39 = sbr.rel (0) target = $region13
    $region12: #{tpu_custom_call.1} parent=1 // pred_region
      _
    $region13: #{tpu_custom_call.1} parent=1 // pred_fallthru
      _
    // Predicated region
    $region14: #{tpu_custom_call.1} parent=1 // pred_check
      _
    $region15: #{tpu_custom_call.1} parent=1 // pred_check_branch
      %41 = sbr.rel (0) target = $region17
    $region16: #{tpu_custom_call.1} parent=1 // pred_region
      _
    $region17: #{tpu_custom_call.1} parent=1 // pred_fallthru
      _
    // Predicated region
    $region18: #{tpu_custom_call.1} parent=1 // pred_check
      _
    $region19: #{tpu_custom_call.1} parent=1 // pred_check_branch
      %43 = sbr.rel (0) target = $region21
    $region20: #{tpu_custom_call.1} parent=1 // pred_region
      _
    $region21: #{tpu_custom_call.1} parent=1 // pred_fallthru
      _
    // Predicated region
    $region22: #{tpu_custom_call.1} parent=1 // pred_check
      _
    $region23: #{tpu_custom_call.1} parent=1 // pred_check_branch
      %45 = sbr.rel (0) target = $region25
    $region24: #{tpu_custom_call.1} parent=1 // pred_region
      %47 = dma.done [#allocation4], 128
    $region25: #{tpu_custom_call.1} parent=1 // pred_fallthru
      _
    // Predicated region
    $region26: #{tpu_custom_call.1} parent=1 // pred_check
      _
    $region27: #{tpu_custom_call.1} parent=1 // pred_check_branch
      %49 = sbr.rel (0) target = $region29
    $region28: #{tpu_custom_call.1} parent=1 // pred_region
      %51 = dma.done [#allocation7], 2048
    $region29: #{tpu_custom_call.1} parent=1 // pred_fallthru
      _
    %v52 = vld [vmem:[#allocation3] sm:$0xff]
    %v53 = vlaneseq
    %v54 = vand.u32 %v53, 127
    %55 = vset.pattern.permute.xlu0 0
    %56 = vperm.xlu0 %55, %v52
    %v57 = vpop.permute.xlu0 %56
    %vm58 = vcmp.eq.s32.totalorder %v57, %v54
    %v59 = vsel %vm58, 1, 0
    %v60 = vcvt.s32.f32 %v59
    %v61 = vadd.f32 %v60, 0.0
    %62 = vset.pattern.permute.xlu0 1
    %63 = vperm.xlu0 %62, %v52
    %v64 = vpop.permute.xlu0 %63
    %vm65 = vcmp.eq.s32.totalorder %v64, %v54
    %v66 = vsel %vm65, 1, 0
    %v67 = vcvt.s32.f32 %v66
    %v68 = vadd.f32 %v61, %v67
    %69 = vset.pattern.permute.xlu0 2
    %70 = vperm.xlu0 %69, %v52
    %v71 = vpop.permute.xlu0 %70
    %vm72 = vcmp.eq.s32.totalorder %v71, %v54
    %v73 = vsel %vm72, 1, 0
    %v74 = vcvt.s32.f32 %v73
    %v75 = vadd.f32 %v68, %v74
    %76 = vset.pattern.permute.xlu0 3
    %77 = vperm.xlu0 %76, %v52
    %v78 = vpop.permute.xlu0 %77
    %vm79 = vcmp.eq.s32.totalorder %v78, %v54
    %v80 = vsel %vm79, 1, 0
    %v81 = vcvt.s32.f32 %v80
    %v82 = vadd.f32 %v75, %v81
    %83 = vset.pattern.permute.xlu0 4
    %84 = vperm.xlu0 %83, %v52
    %v85 = vpop.permute.xlu0 %84
    %vm86 = vcmp.eq.s32.totalorder %v85, %v54
    %v87 = vsel %vm86, 1, 0
    %v88 = vcvt.s32.f32 %v87
    %v89 = vadd.f32 %v82, %v88
    %90 = vset.pattern.permute.xlu0 5
    %91 = vperm.xlu0 %90, %v52
    %v92 = vpop.permute.xlu0 %91
    %vm93 = vcmp.eq.s32.totalorder %v92, %v54
    %v94 = vsel %vm93, 1, 0
    %v95 = vcvt.s32.f32 %v94
    %v96 = vadd.f32 %v89, %v95
    %97 = vset.pattern.permute.xlu0 6
    %98 = vperm.xlu0 %97, %v52
    %v99 = vpop.permute.xlu0 %98
    %vm100 = vcmp.eq.s32.totalorder %v99, %v54
    %v101 = vsel %vm100, 1, 0
    %v102 = vcvt.s32.f32 %v101
    %v103 = vadd.f32 %v96, %v102
    %104 = vset.pattern.permute.xlu0 7
    %105 = vperm.xlu0 %104, %v52
    %v106 = vpop.permute.xlu0 %105
    %vm107 = vcmp.eq.s32.totalorder %v106, %v54
    %v108 = vsel %vm107, 1, 0
    %v109 = vcvt.s32.f32 %v108
    %v110 = vadd.f32 %v103, %v109
    %111 = vset.pattern.permute.xlu0 8
    %112 = vperm.xlu0 %111, %v52
    %v113 = vpop.permute.xlu0 %112
    %vm114 = vcmp.eq.s32.totalorder %v113, %v54
    %v115 = vsel %vm114, 1, 0
    %v116 = vcvt.s32.f32 %v115
    %v117 = vadd.f32 %v110, %v116
    %118 = vset.pattern.permute.xlu0 9
    %119 = vperm.xlu0 %118, %v52
    %v120 = vpop.permute.xlu0 %119
    %vm121 = vcmp.eq.s32.totalorder %v120, %v54
    %v122 = vsel %vm121, 1, 0
    %v123 = vcvt.s32.f32 %v122
    %v124 = vadd.f32 %v117, %v123
    %125 = vset.pattern.permute.xlu0 10
    %126 = vperm.xlu0 %125, %v52
    %v127 = vpop.permute.xlu0 %126
    %vm128 = vcmp.eq.s32.totalorder %v127, %v54
    %v129 = vsel %vm128, 1, 0
    %v130 = vcvt.s32.f32 %v129
    %v131 = vadd.f32 %v124, %v130
    %132 = vset.pattern.permute.xlu0 11
    %133 = vperm.xlu0 %132, %v52
    %v134 = vpop.permute.xlu0 %133
    %vm135 = vcmp.eq.s32.totalorder %v134, %v54
    %v136 = vsel %vm135, 1, 0
    %v137 = vcvt.s32.f32 %v136
    %v138 = vadd.f32 %v131, %v137
    %139 = vset.pattern.permute.xlu0 12
    %140 = vperm.xlu0 %139, %v52
    %v141 = vpop.permute.xlu0 %140
    %vm142 = vcmp.eq.s32.totalorder %v141, %v54
    %v143 = vsel %vm142, 1, 0
    %v144 = vcvt.s32.f32 %v143
    %v145 = vadd.f32 %v138, %v144
    %146 = vset.pattern.permute.xlu0 13
    %147 = vperm.xlu0 %146, %v52
    %v148 = vpop.permute.xlu0 %147
    %vm149 = vcmp.eq.s32.totalorder %v148, %v54
    %v150 = vsel %vm149, 1, 0
    %v151 = vcvt.s32.f32 %v150
    %v152 = vadd.f32 %v145, %v151
    %153 = vset.pattern.permute.xlu0 14
    %154 = vperm.xlu0 %153, %v52
    %v155 = vpop.permute.xlu0 %154
    %vm156 = vcmp.eq.s32.totalorder %v155, %v54
    %v157 = vsel %vm156, 1, 0
    %v158 = vcvt.s32.f32 %v157
    %v159 = vadd.f32 %v152, %v158
    %160 = vset.pattern.permute.xlu0 15
    %161 = vperm.xlu0 %160, %v52
    %v162 = vpop.permute.xlu0 %161
    %vm163 = vcmp.eq.s32.totalorder %v162, %v54
    %v164 = vsel %vm163, 1, 0
    %v165 = vcvt.s32.f32 %v164
    %v166 = vadd.f32 %v159, %v165
    %167 = vset.pattern.permute.xlu0 16
    %168 = vperm.xlu0 %167, %v52
    %v169 = vpop.permute.xlu0 %168
    %vm170 = vcmp.eq.s32.totalorder %v169, %v54
    %v171 = vsel %vm170, 1, 0
    %v172 = vcvt.s32.f32 %v171
    %v173 = vadd.f32 %v172, 0.0
    %174 = vset.pattern.permute.xlu0 17
    %175 = vperm.xlu0 %174, %v52
    %v176 = vpop.permute.xlu0 %175
    %vm177 = vcmp.eq.s32.totalorder %v176, %v54
    %v178 = vsel %vm177, 1, 0
    %v179 = vcvt.s32.f32 %v178
    %v180 = vadd.f32 %v173, %v179
    %181 = vset.pattern.permute.xlu0 18
    %182 = vperm.xlu0 %181, %v52
    %v183 = vpop.permute.xlu0 %182
    %vm184 = vcmp.eq.s32.totalorder %v183, %v54
    %v185 = vsel %vm184, 1, 0
    %v186 = vcvt.s32.f32 %v185
    %v187 = vadd.f32 %v180, %v186
    %188 = vset.pattern.permute.xlu0 19
    %189 = vperm.xlu0 %188, %v52
    %v190 = vpop.permute.xlu0 %189
    %vm191 = vcmp.eq.s32.totalorder %v190, %v54
    %v192 = vsel %vm191, 1, 0
    %v193 = vcvt.s32.f32 %v192
    %v194 = vadd.f32 %v187, %v193
    %195 = vset.pattern.permute.xlu0 20
    %196 = vperm.xlu0 %195, %v52
    %v197 = vpop.permute.xlu0 %196
    %vm198 = vcmp.eq.s32.totalorder %v197, %v54
    %v199 = vsel %vm198, 1, 0
    %v200 = vcvt.s32.f32 %v199
    %v201 = vadd.f32 %v194, %v200
    %202 = vset.pattern.permute.xlu0 21
    %203 = vperm.xlu0 %202, %v52
    %v204 = vpop.permute.xlu0 %203
    %vm205 = vcmp.eq.s32.totalorder %v204, %v54
    %v206 = vsel %vm205, 1, 0
    %v207 = vcvt.s32.f32 %v206
    %v208 = vadd.f32 %v201, %v207
    %209 = vset.pattern.permute.xlu0 22
    %210 = vperm.xlu0 %209, %v52
    %v211 = vpop.permute.xlu0 %210
    %vm212 = vcmp.eq.s32.totalorder %v211, %v54
    %v213 = vsel %vm212, 1, 0
    %v214 = vcvt.s32.f32 %v213
    %v215 = vadd.f32 %v208, %v214
    %216 = vset.pattern.permute.xlu0 23
    %217 = vperm.xlu0 %216, %v52
    %v218 = vpop.permute.xlu0 %217
    %vm219 = vcmp.eq.s32.totalorder %v218, %v54
    %v220 = vsel %vm219, 1, 0
    %v221 = vcvt.s32.f32 %v220
    %v222 = vadd.f32 %v215, %v221
    %v223 = vpack.c.bf16 %v166, %v166
    %v224 = vpack.c.bf16 %v222, %v222
    %v225 = vld [vmem:[#allocation6] sm:$0xf]
    %v226 = vld [vmem:[#allocation6 + $0x4] sm:$0xf]
    %v227 = vld [vmem:[#allocation6 + $0x8] sm:$0xf]
    %v228 = vld [vmem:[#allocation6 + $0xc] sm:$0xf]
    %v229 = vld [vmem:[#allocation6 + $0x10] sm:$0xf]
    %v230 = vld [vmem:[#allocation6 + $0x14] sm:$0xf]
    %v231 = vld [vmem:[#allocation6 + $0x18] sm:$0xf]
    %v232 = vld [vmem:[#allocation6 + $0x1c] sm:$0xf]
    %v233 = vld [vmem:[#allocation6 + $0x20] sm:$0xf]
    %v234 = vld [vmem:[#allocation6 + $0x24] sm:$0xf]
    %v235 = vld [vmem:[#allocation6 + $0x28] sm:$0xf]
    %v236 = vld [vmem:[#allocation6 + $0x2c] sm:$0xf]
    %v237 = vld [vmem:[#allocation6 + $0x30] sm:$0xf]
    %v238 = vld [vmem:[#allocation6 + $0x34] sm:$0xf]
    %v239 = vld [vmem:[#allocation6 + $0x38] sm:$0xf]
    %v240 = vld [vmem:[#allocation6 + $0x3c] sm:$0xf]
    %v241 = vld [vmem:[#allocation6 + $0x40] sm:$0xf]
    %v242 = vld [vmem:[#allocation6 + $0x44] sm:$0xf]
    %v243 = vld [vmem:[#allocation6 + $0x48] sm:$0xf]
    %v244 = vld [vmem:[#allocation6 + $0x4c] sm:$0xf]
    %v245 = vld [vmem:[#allocation6 + $0x50] sm:$0xf]
    %v246 = vld [vmem:[#allocation6 + $0x54] sm:$0xf]
    %v247 = vld [vmem:[#allocation6 + $0x58] sm:$0xf]
    %v248 = vld [vmem:[#allocation6 + $0x5c] sm:$0xf]
    %v249 = vld [vmem:[#allocation6 + $0x60] sm:$0xf]
    %v250 = vld [vmem:[#allocation6 + $0x64] sm:$0xf]
    %v251 = vld [vmem:[#allocation6 + $0x68] sm:$0xf]
    %v252 = vld [vmem:[#allocation6 + $0x6c] sm:$0xf]
    %v253 = vld [vmem:[#allocation6 + $0x70] sm:$0xf]
    %v254 = vld [vmem:[#allocation6 + $0x74] sm:$0xf]
    %v255 = vld [vmem:[#allocation6 + $0x78] sm:$0xf]
    %v256 = vld [vmem:[#allocation6 + $0x7c] sm:$0xf]
    %v257 = vld [vmem:[%s2] sm:$0x1]
    %v259 = vperm.slane %v257, 0
    %v293 = vunpack.c.l.b16 %v225
    %v294 = vunpack.c.l.b16 %v226
    %v295 = vunpack.c.l.b16 %v227
    %v296 = vunpack.c.l.b16 %v228
    %v297 = vunpack.c.l.b16 %v229
    %v298 = vunpack.c.l.b16 %v230
    %v299 = vunpack.c.l.b16 %v231
    %v300 = vunpack.c.l.b16 %v232
    %v301 = vunpack.c.l.b16 %v233
    %v302 = vunpack.c.l.b16 %v234
    %v303 = vunpack.c.l.b16 %v235
    %v304 = vunpack.c.l.b16 %v236
    %v305 = vunpack.c.l.b16 %v237
    %v306 = vunpack.c.l.b16 %v238
    %v307 = vunpack.c.l.b16 %v239
    %v308 = vunpack.c.l.b16 %v240
    %v309 = vunpack.c.l.b16 %v241
    %v310 = vunpack.c.l.b16 %v242
    %v311 = vunpack.c.l.b16 %v243
    %v312 = vunpack.c.l.b16 %v244
    %v313 = vunpack.c.l.b16 %v245
    %v314 = vunpack.c.l.b16 %v246
    %v315 = vunpack.c.l.b16 %v247
    %v316 = vunpack.c.l.b16 %v248
    %v317 = vunpack.c.l.b16 %v249
    %v318 = vunpack.c.l.b16 %v250
    %v319 = vunpack.c.l.b16 %v251
    %v320 = vunpack.c.l.b16 %v252
    %v321 = vunpack.c.l.b16 %v253
    %v322 = vunpack.c.l.b16 %v254
    %v323 = vunpack.c.l.b16 %v255
    %v324 = vunpack.c.l.b16 %v256
    %v325 = vpack.c.b16 %v294, %v293
    %v326 = vpack.c.b16 %v296, %v295
    %v327 = vpack.c.b16 %v298, %v297
    %v328 = vpack.c.b16 %v300, %v299
    %v329 = vpack.c.b16 %v302, %v301
    %v330 = vpack.c.b16 %v304, %v303
    %v331 = vpack.c.b16 %v306, %v305
    %v332 = vpack.c.b16 %v308, %v307
    %v333 = vpack.c.b16 %v310, %v309
    %v334 = vpack.c.b16 %v312, %v311
    %v335 = vpack.c.b16 %v314, %v313
    %v336 = vpack.c.b16 %v316, %v315
    %v337 = vpack.c.b16 %v318, %v317
    %v338 = vpack.c.b16 %v320, %v319
    %v339 = vpack.c.b16 %v322, %v321
    %v340 = vpack.c.b16 %v324, %v323
    %357 = vmatpush.bf16.msra.mxu0 %v332
    %358 = vmatpush.bf16.msra.mxu0 %v331
    %359 = vmatpush.bf16.msra.mxu0 %v330
    %360 = vmatpush.bf16.msra.mxu0 %v329
    %361 = vmatpush.bf16.msra.mxu0 %v328
    %362 = vmatpush.bf16.msra.mxu0 %v327
    %363 = vmatpush.bf16.msra.mxu0 %v326
    %364 = vmatpush.bf16.msra.mxu0 %v325
    %365 = vmatmul.bf16.gmra.mxu0 %v223
    %v366 = vpop.f32.mrf.mxu0
    %v367 = vadd.f32 %v259, %v366
    %v368 = vpop.f32.mrf.mxu0
    %369 = vdwg.mxu0
    %370 = vmatpush.bf16.msra.mxu0 %v340
    %371 = vmatpush.bf16.msra.mxu0 %v339
    %372 = vmatpush.bf16.msra.mxu0 %v338
    %373 = vmatpush.bf16.msra.mxu0 %v337
    %374 = vmatpush.bf16.msra.mxu0 %v336
    %375 = vmatpush.bf16.msra.mxu0 %v335
    %376 = vmatpush.bf16.msra.mxu0 %v334
    %377 = vmatpush.bf16.msra.mxu0 %v333
    %378 = vmatmul.bf16.gmra.mxu0 %v224
    %v379 = vpop.f32.mrf.mxu0
    %v380 = vadd.f32 %v367, %v379
    %v381 = vpop.f32.mrf.mxu0
    %382 = vdwg.mxu0
    %v383 = vmax.f32 %v380, 0.0
    %v384 = vld [vmem:[%s3] sm:$0x1]
    %v386 = vperm.slane %v384, 0
    %v388 = vmul.f32 %v383, %v386
    %389 = vadd.xlane.f32.xlu0 %v388
    %v390 = vpop.xlane.xlu0 %389
    %s391 = sld [smem:[#allocation2]]
    %v392 = vstv %s391
    %v393 = vadd.f32 %v390, %v392
    %v394 = vsub.f32 0.0, %v393
    %v395 = vmul.f32 %v394, 1.442695
    %v396 = vpow.pop %v395
    %v397 = vadd.f32 %v396, 1.0
    %v398 = vrcp.pop %v397
    %399 = vst [vmem:[#allocation8] sm:$0xff] %v398
    // Predicated region
    $region30: #{tpu_custom_call.1} parent=1 // pred_check
      _
    $region31: #{tpu_custom_call.1} parent=1 // pred_check_branch
      %401 = sbr.rel (0) target = $region33
    $region32: #{tpu_custom_call.1} parent=1 // pred_region
      %403 = vsyncadd [#allocation5], 0
      %s405 = sshll.u32 [#allocation8], 4
      %s406 = int_to_ptr.vmem [resolvable:$true] %s405
      %s407 = sshll.u32 %s5, 4
      %s408 = int_to_ptr.hbm [resolvable:$true] %s407
      %410 = dma.vmem_to_hbm [thread:$0]  %s406, 128, %s408, [#allocation5]
    $region33: #{tpu_custom_call.1} parent=1 // pred_fallthru
      _
    // Predicated region
    $region34: #{tpu_custom_call.1} parent=1 // pred_check
      _
    $region35: #{tpu_custom_call.1} parent=1 // pred_check_branch
      %412 = sbr.rel (0) target = $region37
    $region36: #{tpu_custom_call.1} parent=1 // pred_region
      %414 = dma.done [#allocation5], 128
    $region37: #{tpu_custom_call.1} parent=1 // pred_fallthru
      _
    %415 = vsyncpa [#allocation4], 1
    %416 = vsyncpa [#allocation7], 1
    %417 = vsyncpa [#allocation5], 1

// kernel: tpu_custom_call.1
$region0: #{tpu_custom_call.1}
  #allocation0 [shape = 'u32[]', space=smem, size = 0x4, offset = 0x4, fixed_abs, tag = 'smem constant byte address 0x4 - core index']
  #allocation1 [shape = 'u32[72,128]{1,0:T(1,128)}', space=vmem, size = 0x9000, scoped, tag = 'internal scratch']
  #allocation2 [shape = 'f32[1,1]{1,0:T(1,128)S(6)}', space=smem, size = 0x200, scoped, tag = 'scoped memory for tpu_custom_call.1']
  %s0 = inlined_call_operand.hbm [shape: s32[8,24], index: 0, kind: input, shape index: {}]
  %s1 = inlined_call_operand.hbm [shape: bf16[256,128], index: 1, kind: input, shape index: {}]
  %s2 = inlined_call_operand.vmem [shape: f32[1,128], index: 2, kind: input, shape index: {}]
  %s3 = inlined_call_operand.vmem [shape: f32[1,128], index: 3, kind: input, shape index: {}]
  %s4 = inlined_call_operand.<no memory space> [shape: f32[1,1], index: 4, kind: input, shape index: {}]
  %s5 = inlined_call_operand.hbm [shape: f32[8,128], index: 5, kind: output, shape index: {}]
  %s6 = sld [smem:[#allocation0]]
  $region38: #{tpu_custom_call.1} parent=0
    _
  %s8 = ssub.s32 1, %s6
  %s9 = scalar_select 0, %s8, %s6
  %10 = sst [smem:[#allocation2]] %s4
  $region1: #{tpu_custom_call.1} parent=0
    #allocation3 [shape = 'u8[4096]{0}', space=vmem, size = 0x1000, scoped, tag = 'input window, operand 0, single buffered']
    #allocation4 [shape = 's32[1]{0}', space=sflag, size = 0x4, scoped, tag = 'scoped memory for tpu_custom_call.1']
    #allocation5 [shape = 's32[1]{0}', space=sflag, size = 0x4, scoped, tag = 'scoped memory for tpu_custom_call.1']
    #allocation6 [shape = 'u8[65536]{0}', space=vmem, size = 0x10000, scoped, tag = 'input window, operand 1, single buffered']
    #allocation7 [shape = 's32[1]{0}', space=sflag, size = 0x4, scoped, tag = 'scoped memory for tpu_custom_call.1']
    #allocation8 [shape = 'u8[4096]{0}', space=vmem, size = 0x1000, scoped, tag = 'output window, operand 0, single buffered']
    %11 = vsyncpa [#allocation4], 0
    %12 = vsyncpa [#allocation7], 0
    %13 = vsyncpa [#allocation5], 0
    // Predicated region
    $region2: #{tpu_custom_call.1} parent=1 // pred_check
      _
    $region3: #{tpu_custom_call.1} parent=1 // pred_check_branch
      %15 = sbr.rel (0) target = $region5
    $region4: #{tpu_custom_call.1} parent=1 // pred_region
      %17 = vsyncadd [#allocation4], 0
      %s19 = sshll.u32 %s0, 4
      %s20 = int_to_ptr.hbm [resolvable:$true] %s19
      %s21 = sshll.u32 [#allocation3], 4
      %s22 = int_to_ptr.vmem [resolvable:$true] %s21
      %24 = dma.hbm_to_vmem [thread:$0]  %s20, 128, %s22, [#allocation4]
    $region5: #{tpu_custom_call.1} parent=1 // pred_fallthru
      _
    // Predicated region
    $region6: #{tpu_custom_call.1} parent=1 // pred_check
      _
    $region7: #{tpu_custom_call.1} parent=1 // pred_check_branch
      %26 = sbr.rel (0) target = $region9
    $region8: #{tpu_custom_call.1} parent=1 // pred_region
      %28 = vsyncadd [#allocation7], 0
      %s29 = sshll.u32 %s1, 4
      %s30 = int_to_ptr.hbm [resolvable:$true] %s29
      %s31 = sshll.u32 [#allocation6], 4
      %s32 = int_to_ptr.vmem [resolvable:$true] %s31
      %37 = dma.hbm_to_vmem [thread:$0]  %s30, 2048, %s32, [#allocation7], 64, 64, 4
    $region9: #{tpu_custom_call.1} parent=1 // pred_fallthru
      _
    // Predicated region
    $region10: #{tpu_custom_call.1} parent=1 // pred_check
      _
    $region11: #{tpu_custom_call.1} parent=1 // pred_check_branch
      %39 = sbr.rel (0) target = $region13
    $region12: #{tpu_custom_call.1} parent=1 // pred_region
      _
    $region13: #{tpu_custom_call.1} parent=1 // pred_fallthru
      _
    // Predicated region
    $region14: #{tpu_custom_call.1} parent=1 // pred_check
      _
    $region15: #{tpu_custom_call.1} parent=1 // pred_check_branch
      %41 = sbr.rel (0) target = $region17
    $region16: #{tpu_custom_call.1} parent=1 // pred_region
      _
    $region17: #{tpu_custom_call.1} parent=1 // pred_fallthru
      _
    // Predicated region
    $region18: #{tpu_custom_call.1} parent=1 // pred_check
      _
    $region19: #{tpu_custom_call.1} parent=1 // pred_check_branch
      %43 = sbr.rel (0) target = $region21
    $region20: #{tpu_custom_call.1} parent=1 // pred_region
      _
    $region21: #{tpu_custom_call.1} parent=1 // pred_fallthru
      _
    // Predicated region
    $region22: #{tpu_custom_call.1} parent=1 // pred_check
      _
    $region23: #{tpu_custom_call.1} parent=1 // pred_check_branch
      %45 = sbr.rel (0) target = $region25
    $region24: #{tpu_custom_call.1} parent=1 // pred_region
      %47 = dma.done [#allocation4], 128
    $region25: #{tpu_custom_call.1} parent=1 // pred_fallthru
      _
    // Predicated region
    $region26: #{tpu_custom_call.1} parent=1 // pred_check
      _
    $region27: #{tpu_custom_call.1} parent=1 // pred_check_branch
      %49 = sbr.rel (0) target = $region29
    $region28: #{tpu_custom_call.1} parent=1 // pred_region
      %51 = dma.done [#allocation7], 2048
    $region29: #{tpu_custom_call.1} parent=1 // pred_fallthru
      _
    %v52 = vld [vmem:[#allocation3] sm:$0xff]
    %v53 = vlaneseq
    %v54 = vand.u32 %v53, 127
    %55 = vset.pattern.permute.xlu0 0
    %56 = vperm.xlu0 %55, %v52
    %v57 = vpop.permute.xlu0 %56
    %vm58 = vcmp.eq.s32.totalorder %v57, %v54
    %v59 = vsel %vm58, 1, 0
    %v60 = vcvt.s32.f32 %v59
    %v61 = vadd.f32 %v60, 0.0
    %62 = vset.pattern.permute.xlu0 1
    %63 = vperm.xlu0 %62, %v52
    %v64 = vpop.permute.xlu0 %63
    %vm65 = vcmp.eq.s32.totalorder %v64, %v54
    %v66 = vsel %vm65, 1, 0
    %v67 = vcvt.s32.f32 %v66
    %v68 = vadd.f32 %v61, %v67
    %69 = vset.pattern.permute.xlu0 2
    %70 = vperm.xlu0 %69, %v52
    %v71 = vpop.permute.xlu0 %70
    %vm72 = vcmp.eq.s32.totalorder %v71, %v54
    %v73 = vsel %vm72, 1, 0
    %v74 = vcvt.s32.f32 %v73
    %v75 = vadd.f32 %v68, %v74
    %76 = vset.pattern.permute.xlu0 3
    %77 = vperm.xlu0 %76, %v52
    %v78 = vpop.permute.xlu0 %77
    %vm79 = vcmp.eq.s32.totalorder %v78, %v54
    %v80 = vsel %vm79, 1, 0
    %v81 = vcvt.s32.f32 %v80
    %v82 = vadd.f32 %v75, %v81
    %83 = vset.pattern.permute.xlu0 4
    %84 = vperm.xlu0 %83, %v52
    %v85 = vpop.permute.xlu0 %84
    %vm86 = vcmp.eq.s32.totalorder %v85, %v54
    %v87 = vsel %vm86, 1, 0
    %v88 = vcvt.s32.f32 %v87
    %v89 = vadd.f32 %v82, %v88
    %90 = vset.pattern.permute.xlu0 5
    %91 = vperm.xlu0 %90, %v52
    %v92 = vpop.permute.xlu0 %91
    %vm93 = vcmp.eq.s32.totalorder %v92, %v54
    %v94 = vsel %vm93, 1, 0
    %v95 = vcvt.s32.f32 %v94
    %v96 = vadd.f32 %v89, %v95
    %97 = vset.pattern.permute.xlu0 6
    %98 = vperm.xlu0 %97, %v52
    %v99 = vpop.permute.xlu0 %98
    %vm100 = vcmp.eq.s32.totalorder %v99, %v54
    %v101 = vsel %vm100, 1, 0
    %v102 = vcvt.s32.f32 %v101
    %v103 = vadd.f32 %v96, %v102
    %104 = vset.pattern.permute.xlu0 7
    %105 = vperm.xlu0 %104, %v52
    %v106 = vpop.permute.xlu0 %105
    %vm107 = vcmp.eq.s32.totalorder %v106, %v54
    %v108 = vsel %vm107, 1, 0
    %v109 = vcvt.s32.f32 %v108
    %v110 = vadd.f32 %v103, %v109
    %111 = vset.pattern.permute.xlu0 8
    %112 = vperm.xlu0 %111, %v52
    %v113 = vpop.permute.xlu0 %112
    %vm114 = vcmp.eq.s32.totalorder %v113, %v54
    %v115 = vsel %vm114, 1, 0
    %v116 = vcvt.s32.f32 %v115
    %v117 = vadd.f32 %v110, %v116
    %118 = vset.pattern.permute.xlu0 9
    %119 = vperm.xlu0 %118, %v52
    %v120 = vpop.permute.xlu0 %119
    %vm121 = vcmp.eq.s32.totalorder %v120, %v54
    %v122 = vsel %vm121, 1, 0
    %v123 = vcvt.s32.f32 %v122
    %v124 = vadd.f32 %v117, %v123
    %125 = vset.pattern.permute.xlu0 10
    %126 = vperm.xlu0 %125, %v52
    %v127 = vpop.permute.xlu0 %126
    %vm128 = vcmp.eq.s32.totalorder %v127, %v54
    %v129 = vsel %vm128, 1, 0
    %v130 = vcvt.s32.f32 %v129
    %v131 = vadd.f32 %v124, %v130
    %132 = vset.pattern.permute.xlu0 11
    %133 = vperm.xlu0 %132, %v52
    %v134 = vpop.permute.xlu0 %133
    %vm135 = vcmp.eq.s32.totalorder %v134, %v54
    %v136 = vsel %vm135, 1, 0
    %v137 = vcvt.s32.f32 %v136
    %v138 = vadd.f32 %v131, %v137
    %139 = vset.pattern.permute.xlu0 12
    %140 = vperm.xlu0 %139, %v52
    %v141 = vpop.permute.xlu0 %140
    %vm142 = vcmp.eq.s32.totalorder %v141, %v54
    %v143 = vsel %vm142, 1, 0
    %v144 = vcvt.s32.f32 %v143
    %v145 = vadd.f32 %v138, %v144
    %146 = vset.pattern.permute.xlu0 13
    %147 = vperm.xlu0 %146, %v52
    %v148 = vpop.permute.xlu0 %147
    %vm149 = vcmp.eq.s32.totalorder %v148, %v54
    %v150 = vsel %vm149, 1, 0
    %v151 = vcvt.s32.f32 %v150
    %v152 = vadd.f32 %v145, %v151
    %153 = vset.pattern.permute.xlu0 14
    %154 = vperm.xlu0 %153, %v52
    %v155 = vpop.permute.xlu0 %154
    %vm156 = vcmp.eq.s32.totalorder %v155, %v54
    %v157 = vsel %vm156, 1, 0
    %v158 = vcvt.s32.f32 %v157
    %v159 = vadd.f32 %v152, %v158
    %160 = vset.pattern.permute.xlu0 15
    %161 = vperm.xlu0 %160, %v52
    %v162 = vpop.permute.xlu0 %161
    %vm163 = vcmp.eq.s32.totalorder %v162, %v54
    %v164 = vsel %vm163, 1, 0
    %v165 = vcvt.s32.f32 %v164
    %v166 = vadd.f32 %v159, %v165
    %167 = vset.pattern.permute.xlu0 16
    %168 = vperm.xlu0 %167, %v52
    %v169 = vpop.permute.xlu0 %168
    %vm170 = vcmp.eq.s32.totalorder %v169, %v54
    %v171 = vsel %vm170, 1, 0
    %v172 = vcvt.s32.f32 %v171
    %v173 = vadd.f32 %v172, 0.0
    %174 = vset.pattern.permute.xlu0 17
    %175 = vperm.xlu0 %174, %v52
    %v176 = vpop.permute.xlu0 %175
    %vm177 = vcmp.eq.s32.totalorder %v176, %v54
    %v178 = vsel %vm177, 1, 0
    %v179 = vcvt.s32.f32 %v178
    %v180 = vadd.f32 %v173, %v179
    %181 = vset.pattern.permute.xlu0 18
    %182 = vperm.xlu0 %181, %v52
    %v183 = vpop.permute.xlu0 %182
    %vm184 = vcmp.eq.s32.totalorder %v183, %v54
    %v185 = vsel %vm184, 1, 0
    %v186 = vcvt.s32.f32 %v185
    %v187 = vadd.f32 %v180, %v186
    %188 = vset.pattern.permute.xlu0 19
    %189 = vperm.xlu0 %188, %v52
    %v190 = vpop.permute.xlu0 %189
    %vm191 = vcmp.eq.s32.totalorder %v190, %v54
    %v192 = vsel %vm191, 1, 0
    %v193 = vcvt.s32.f32 %v192
    %v194 = vadd.f32 %v187, %v193
    %195 = vset.pattern.permute.xlu0 20
    %196 = vperm.xlu0 %195, %v52
    %v197 = vpop.permute.xlu0 %196
    %vm198 = vcmp.eq.s32.totalorder %v197, %v54
    %v199 = vsel %vm198, 1, 0
    %v200 = vcvt.s32.f32 %v199
    %v201 = vadd.f32 %v194, %v200
    %202 = vset.pattern.permute.xlu0 21
    %203 = vperm.xlu0 %202, %v52
    %v204 = vpop.permute.xlu0 %203
    %vm205 = vcmp.eq.s32.totalorder %v204, %v54
    %v206 = vsel %vm205, 1, 0
    %v207 = vcvt.s32.f32 %v206
    %v208 = vadd.f32 %v201, %v207
    %209 = vset.pattern.permute.xlu0 22
    %210 = vperm.xlu0 %209, %v52
    %v211 = vpop.permute.xlu0 %210
    %vm212 = vcmp.eq.s32.totalorder %v211, %v54
    %v213 = vsel %vm212, 1, 0
    %v214 = vcvt.s32.f32 %v213
    %v215 = vadd.f32 %v208, %v214
    %216 = vset.pattern.permute.xlu0 23
    %217 = vperm.xlu0 %216, %v52
    %v218 = vpop.permute.xlu0 %217
    %vm219 = vcmp.eq.s32.totalorder %v218, %v54
    %v220 = vsel %vm219, 1, 0
    %v221 = vcvt.s32.f32 %v220
    %v222 = vadd.f32 %v215, %v221
    %v223 = vpack.c.bf16 %v166, %v166
    %v224 = vpack.c.bf16 %v222, %v222
    %v225 = vld [vmem:[#allocation6] sm:$0xf]
    %v226 = vld [vmem:[#allocation6 + $0x4] sm:$0xf]
    %v227 = vld [vmem:[#allocation6 + $0x8] sm:$0xf]
    %v228 = vld [vmem:[#allocation6 + $0xc] sm:$0xf]
    %v229 = vld [vmem:[#allocation6 + $0x10] sm:$0xf]
    %v230 = vld [vmem:[#allocation6 + $0x14] sm:$0xf]
    %v231 = vld [vmem:[#allocation6 + $0x18] sm:$0xf]
    %v232 = vld [vmem:[#allocation6 + $0x1c] sm:$0xf]
    %v233 = vld [vmem:[#allocation6 + $0x20] sm:$0xf]
    %v234 = vld [vmem:[#allocation6 + $0x24] sm:$0xf]
    %v235 = vld [vmem:[#allocation6 + $0x28] sm:$0xf]
    %v236 = vld [vmem:[#allocation6 + $0x2c] sm:$0xf]
    %v237 = vld [vmem:[#allocation6 + $0x30] sm:$0xf]
    %v238 = vld [vmem:[#allocation6 + $0x34] sm:$0xf]
    %v239 = vld [vmem:[#allocation6 + $0x38] sm:$0xf]
    %v240 = vld [vmem:[#allocation6 + $0x3c] sm:$0xf]
    %v241 = vld [vmem:[#allocation6 + $0x40] sm:$0xf]
    %v242 = vld [vmem:[#allocation6 + $0x44] sm:$0xf]
    %v243 = vld [vmem:[#allocation6 + $0x48] sm:$0xf]
    %v244 = vld [vmem:[#allocation6 + $0x4c] sm:$0xf]
    %v245 = vld [vmem:[#allocation6 + $0x50] sm:$0xf]
    %v246 = vld [vmem:[#allocation6 + $0x54] sm:$0xf]
    %v247 = vld [vmem:[#allocation6 + $0x58] sm:$0xf]
    %v248 = vld [vmem:[#allocation6 + $0x5c] sm:$0xf]
    %v249 = vld [vmem:[#allocation6 + $0x60] sm:$0xf]
    %v250 = vld [vmem:[#allocation6 + $0x64] sm:$0xf]
    %v251 = vld [vmem:[#allocation6 + $0x68] sm:$0xf]
    %v252 = vld [vmem:[#allocation6 + $0x6c] sm:$0xf]
    %v253 = vld [vmem:[#allocation6 + $0x70] sm:$0xf]
    %v254 = vld [vmem:[#allocation6 + $0x74] sm:$0xf]
    %v255 = vld [vmem:[#allocation6 + $0x78] sm:$0xf]
    %v256 = vld [vmem:[#allocation6 + $0x7c] sm:$0xf]
    %v257 = vld [vmem:[%s2] sm:$0x1]
    %v259 = vperm.slane %v257, 0
    %v293 = vunpack.c.l.b16 %v225
    %v294 = vunpack.c.l.b16 %v226
    %v295 = vunpack.c.l.b16 %v227
    %v296 = vunpack.c.l.b16 %v228
    %v297 = vunpack.c.l.b16 %v229
    %v298 = vunpack.c.l.b16 %v230
    %v299 = vunpack.c.l.b16 %v231
    %v300 = vunpack.c.l.b16 %v232
    %v301 = vunpack.c.l.b16 %v233
    %v302 = vunpack.c.l.b16 %v234
    %v303 = vunpack.c.l.b16 %v235
    %v304 = vunpack.c.l.b16 %v236
    %v305 = vunpack.c.l.b16 %v237
    %v306 = vunpack.c.l.b16 %v238
    %v307 = vunpack.c.l.b16 %v239
    %v308 = vunpack.c.l.b16 %v240
    %v309 = vunpack.c.l.b16 %v241
    %v310 = vunpack.c.l.b16 %v242
    %v311 = vunpack.c.l.b16 %v243
    %v312 = vunpack.c.l.b16 %v244
    %v313 = vunpack.c.l.b16 %v245
    %v314 = vunpack.c.l.b16 %v246
    %v315 = vunpack.c.l.b16 %v247
    %v316 = vunpack.c.l.b16 %v248
    %v317 = vunpack.c.l.b16 %v249
    %v318 = vunpack.c.l.b16 %v250
    %v319 = vunpack.c.l.b16 %v251
    %v320 = vunpack.c.l.b16 %v252
    %v321 = vunpack.c.l.b16 %v253
    %v322 = vunpack.c.l.b16 %v254
    %v323 = vunpack.c.l.b16 %v255
    %v324 = vunpack.c.l.b16 %v256
    %v325 = vpack.c.b16 %v294, %v293
    %v326 = vpack.c.b16 %v296, %v295
    %v327 = vpack.c.b16 %v298, %v297
    %v328 = vpack.c.b16 %v300, %v299
    %v329 = vpack.c.b16 %v302, %v301
    %v330 = vpack.c.b16 %v304, %v303
    %v331 = vpack.c.b16 %v306, %v305
    %v332 = vpack.c.b16 %v308, %v307
    %v333 = vpack.c.b16 %v310, %v309
    %v334 = vpack.c.b16 %v312, %v311
    %v335 = vpack.c.b16 %v314, %v313
    %v336 = vpack.c.b16 %v316, %v315
    %v337 = vpack.c.b16 %v318, %v317
    %v338 = vpack.c.b16 %v320, %v319
    %v339 = vpack.c.b16 %v322, %v321
    %v340 = vpack.c.b16 %v324, %v323
    %357 = vmatpush.bf16.msra.mxu0 %v332
    %358 = vmatpush.bf16.msra.mxu0 %v331
    %359 = vmatpush.bf16.msra.mxu0 %v330
    %360 = vmatpush.bf16.msra.mxu0 %v329
    %361 = vmatpush.bf16.msra.mxu0 %v328
    %362 = vmatpush.bf16.msra.mxu0 %v327
    %363 = vmatpush.bf16.msra.mxu0 %v326
    %364 = vmatpush.bf16.msra.mxu0 %v325
    %365 = vmatmul.bf16.gmra.mxu0 %v223
    %v366 = vpop.f32.mrf.mxu0
    %v367 = vadd.f32 %v259, %v366
    %v368 = vpop.f32.mrf.mxu0
    %369 = vdwg.mxu0
    %370 = vmatpush.bf16.msra.mxu0 %v340
    %371 = vmatpush.bf16.msra.mxu0 %v339
    %372 = vmatpush.bf16.msra.mxu0 %v338
    %373 = vmatpush.bf16.msra.mxu0 %v337
    %374 = vmatpush.bf16.msra.mxu0 %v336
    %375 = vmatpush.bf16.msra.mxu0 %v335
    %376 = vmatpush.bf16.msra.mxu0 %v334
    %377 = vmatpush.bf16.msra.mxu0 %v333
    %378 = vmatmul.bf16.gmra.mxu0 %v224
    %v379 = vpop.f32.mrf.mxu0
    %v380 = vadd.f32 %v367, %v379
    %v381 = vpop.f32.mrf.mxu0
    %382 = vdwg.mxu0
    %v383 = vmax.f32 %v380, 0.0
    %v384 = vld [vmem:[%s3] sm:$0x1]
    %v386 = vperm.slane %v384, 0
    %v388 = vmul.f32 %v383, %v386
    %389 = vadd.xlane.f32.xlu0 %v388
    %v390 = vpop.xlane.xlu0 %389
    %s391 = sld [smem:[#allocation2]]
    %v392 = vstv %s391
    %v393 = vadd.f32 %v390, %v392
    %v394 = vsub.f32 0.0, %v393
    %v395 = vmul.f32 %v394, 1.442695
    %v396 = vpow.pop %v395
    %v397 = vadd.f32 %v396, 1.0
    %v398 = vrcp.pop %v397
    %399 = vst [vmem:[#allocation8] sm:$0xff] %v398
    // Predicated region
    $region30: #{tpu_custom_call.1} parent=1 // pred_check
      _
    $region31: #{tpu_custom_call.1} parent=1 // pred_check_branch
      %401 = sbr.rel (0) target = $region33
    $region32: #{tpu_custom_call.1} parent=1 // pred_region
      %403 = vsyncadd [#allocation5], 0
      %s405 = sshll.u32 [#allocation8], 4
      %s406 = int_to_ptr.vmem [resolvable:$true] %s405
      %s407 = sshll.u32 %s5, 4
      %s408 = int_to_ptr.hbm [resolvable:$true] %s407
      %410 = dma.vmem_to_hbm [thread:$0]  %s406, 128, %s408, [#allocation5]
    $region33: #{tpu_custom_call.1} parent=1 // pred_fallthru
      _
    // Predicated region
    $region34: #{tpu_custom_call.1} parent=1 // pred_check
      _
    $region35: #{tpu_custom_call.1} parent=1 // pred_check_branch
      %412 = sbr.rel (0) target = $region37
    $region36: #{tpu_custom_call.1} parent=1 // pred_region
      %414 = dma.done [#allocation5], 128
    $region37: #{tpu_custom_call.1} parent=1 // pred_fallthru
      _
    %415 = vsyncpa [#allocation4], 1
    %416 = vsyncpa [#allocation7], 1
    %417 = vsyncpa [#allocation5], 1

</llo_original>
